<compile_context>
chip_gen: v6e
topology: v6e:2x2x1
jax: 0.10.0
libtpu: 0.0.40
codegen_flags: <defaults>
</compile_context>

<pallas_src>
import functools

import jax
import jax.numpy as jnp
from jax.experimental import pallas as pl
from jax.experimental.pallas import tpu as pltpu


# ---------------------------------------------------------------------------
# Kernels
# ---------------------------------------------------------------------------

def _attn_kernel(q_ref, k_ref, v_ref, out_ref, attn_ref, *, inv_scale):
    """Unmasked: one (TH head-group, TQ query-tile) step; K/V resident (full L)."""
    q = q_ref[...] * inv_scale                   # (TH, TQ, Dk); 1/scale folded in
    k = k_ref[...]                               # (TH, L,  Dk)
    v = v_ref[...]                               # (TH, L,  Dk)

    # Batched q @ k^T as dot_general (transposed RHS) -> MXU, no XLU transpose.
    s = jnp.einsum("hqd,hkd->hqk", q, k,
                   preferred_element_type=jnp.float32)      # (TH, TQ, L) f32

    m = jnp.max(s, axis=-1, keepdims=True)
    e = jnp.exp(s - m)
    denom = jnp.sum(e, axis=-1, keepdims=True)
    # Exact reciprocal of the tiny (TH, TQ, 1) denominator, then a single
    # O(L^2) multiply; p is materialized once in the store/matmul dtype.
    p = (e * (1.0 / denom)).astype(attn_ref.dtype)

    attn_ref[...] = p
    out_ref[...] = jnp.einsum("hqk,hkd->hqd", p.astype(v.dtype), v,
                              preferred_element_type=jnp.float32
                              ).astype(out_ref.dtype)


def _attn_kernel_bias(q_ref, k_ref, v_ref, bias_ref, out_ref, attn_ref, *,
                      inv_scale):
    """Masked: additive f32 bias (0 where kept, -1e9 where masked)."""
    q = q_ref[...] * inv_scale                   # (TH, TQ, Dk)
    k = k_ref[...]                               # (TH, L,  Dk)
    v = v_ref[...]                               # (TH, L,  Dk)

    s = jnp.einsum("hqd,hkd->hqk", q, k,
                   preferred_element_type=jnp.float32)      # (TH, TQ, L) f32
    # One vadd instead of int8 unpack + compare + select.  The bias block is
    # (1, TQ, L) (per-batch mask, shared by the TH heads of this block) or
    # (TH, TQ, L) (head-dependent mask).
    s = s + jnp.broadcast_to(bias_ref[...], s.shape)

    m = jnp.max(s, axis=-1, keepdims=True)
    e = jnp.exp(s - m)
    denom = jnp.sum(e, axis=-1, keepdims=True)
    p = (e * (1.0 / denom)).astype(attn_ref.dtype)

    attn_ref[...] = p
    out_ref[...] = jnp.einsum("hqk,hkd->hqd", p.astype(v.dtype), v,
                              preferred_element_type=jnp.float32
                              ).astype(out_ref.dtype)


# ---------------------------------------------------------------------------
# Tiling (VMEM-budgeted)
# ---------------------------------------------------------------------------

def _divisors_desc(n):
    return [d for d in range(n, 0, -1) if n % d == 0]


def _vmem_budget_bytes():
    # Per-step budget for double-buffered blocks + in-kernel f32 temporaries.
    # Sized for the smallest-VMEM generation (v7x: 64 MiB/TC); v5e/v6e
    # (128 MiB) get a somewhat larger budget.
    try:
        info = pltpu.get_tpu_info()
        cap = int(getattr(info, "vmem_capacity_bytes", 64 * 2**20))
    except Exception:  # not on TPU / interpret mode -> assume the smallest.
        cap = 64 * 2**20
    return max(min(cap // 2, 48 * 2**20), 16 * 2**20)


def _footprint_bytes(th, tq, L, Dk, in_esize, out_esize, mask_mode):
    # Input/output blocks are double-buffered by the Pallas pipeline.
    blocks = 2 * (th * tq * Dk * in_esize           # q
                  + 2 * th * L * Dk * in_esize      # k, v (full L resident)
                  + th * tq * Dk * out_esize        # out
                  + th * tq * L * out_esize)        # attn
    if mask_mode == "batch":
        blocks += 2 * tq * L * 4                    # (1, TQ, L) f32 bias
    elif mask_mode == "head":
        blocks += 2 * th * tq * L * 4               # (TH, TQ, L) f32 bias
    temps = 3 * th * tq * L * 4                     # s, e, p live f32 temporaries
    return blocks + temps


def _choose_tiles(H, BH, L, Dk, in_esize, out_esize, mask_mode,
                  max_heads_per_block=None, max_q_tile=None, budget=None):
    """Pick (TH, TQ): largest query tile (<= max_q_tile) first, then as many
    heads per block as fit the VMEM budget."""
    if budget is None:
        budget = _vmem_budget_bytes()
    max_q = 512 if max_q_tile is None else max_q_tile

    # TQ must keep the block's second-minor dim legal: divisible by 8 or == L.
    valid_tq = [d for d in _divisors_desc(L) if d == L or d % 8 == 0]
    tq_cands = [d for d in valid_tq if d <= max_q] or [valid_tq[-1]]

    # Per-batch masks are indexed with i // (H // TH), so TH must divide H;
    # otherwise group heads across the batch (handles prime n_head).
    th_pool = _divisors_desc(H) if mask_mode == "batch" else _divisors_desc(BH)
    if max_heads_per_block is not None:
        th_pool = [t for t in th_pool if t <= max_heads_per_block] or [th_pool[-1]]

    for tq in tq_cands:
        for th in th_pool:
            if _footprint_bytes(th, tq, L, Dk, in_esize, out_esize,
                                mask_mode) <= budget:
                return th, tq
    # Fallback: smallest tiles (may exceed budget for very long L; see TODO).
    return th_pool[-1], tq_cands[-1]


# ---------------------------------------------------------------------------
# Wrapper
# ---------------------------------------------------------------------------

def scaled_dot_product_attention(q, k, v, scale, mask=None, *,
                                 max_heads_per_block=None, max_q_tile=None):
    """q, k, v: (B, n_head, L, d_k); mask broadcastable to (B, n_head, L, L).

    Returns (output, attention): (B, n_head, L, d_k), (B, n_head, L, L),
    both in the input dtype (module contract).
    """
    B, H, L, Dk = q.shape
    BH = B * H
    inv_scale = 1.0 / float(scale)        # Python float -> no captured constant

    out_dtype = q.dtype
    in_esize = q.dtype.itemsize
    out_esize = jnp.dtype(out_dtype).itemsize

    qf = q.reshape(BH, L, Dk)
    kf = k.reshape(BH, L, Dk)
    vf = v.reshape(BH, L, Dk)

    # ---- mask -> additive f32 bias (0 keep, -1e9 masked) -------------------
    mask_mode = "none"
    bias = None
    if mask is not None:
        mask = jnp.asarray(mask)
        if mask.ndim == 4 and mask.shape[1] != 1:
            # Genuinely head-dependent mask: materialize per flattened head.
            mask_mode = "head"
            mfull = jnp.broadcast_to(mask, (B, H, L, L)).reshape(BH, L, L)
            bias = jnp.where(mfull == 0, -1e9, 0.0).astype(jnp.float32)
        else:
            # Typical case: mask broadcasts over heads -> keep one (B, L, L)
            # f32 copy, reused by every head group (small HBM stream).
            mask_mode = "batch"
            if mask.ndim == 4:
                mask = mask[:, 0]
            mb = jnp.broadcast_to(mask, (B, L, L))
            bias = jnp.where(mb == 0, -1e9, 0.0).astype(jnp.float32)

    TH, TQ = _choose_tiles(H, BH, L, Dk, in_esize, out_esize, mask_mode,
                           max_heads_per_block, max_q_tile)
    num_head_blocks = BH // TH
    num_q_tiles = L // TQ

    # ---- block specs --------------------------------------------------------
    q_spec = pl.BlockSpec((TH, TQ, Dk), lambda i, j: (i, j, 0))
    kv_spec = pl.BlockSpec((TH, L, Dk), lambda i, j: (i, 0, 0))   # K/V resident
    out_spec = pl.BlockSpec((TH, TQ, Dk), lambda i, j: (i, j, 0))
    attn_spec = pl.BlockSpec((TH, TQ, L), lambda i, j: (i, j, 0))

    out_shapes = (
        jax.ShapeDtypeStruct((BH, L, Dk), out_dtype),
        jax.ShapeDtypeStruct((BH, L, L), out_dtype),
    )

    if mask_mode == "none":
        kernel = functools.partial(_attn_kernel, inv_scale=inv_scale)
        in_specs = [q_spec, kv_spec, kv_spec]
        args = (qf, kf, vf)
    elif mask_mode == "batch":
        gpb = H // TH                      # head groups per batch (TH divides H)
        kernel = functools.partial(_attn_kernel_bias, inv_scale=inv_scale)
        bias_spec = pl.BlockSpec((1, TQ, L), lambda i, j: (i // gpb, j, 0))
        in_specs = [q_spec, kv_spec, kv_spec, bias_spec]
        args = (qf, kf, vf, bias)
    else:  # head-dependent mask
        kernel = functools.partial(_attn_kernel_bias, inv_scale=inv_scale)
        bias_spec = pl.BlockSpec((TH, TQ, L), lambda i, j: (i, j, 0))
        in_specs = [q_spec, kv_spec, kv_spec, bias_spec]
        args = (qf, kf, vf, bias)

    footprint = _footprint_bytes(TH, TQ, L, Dk, in_esize, out_esize, mask_mode)
    vmem_limit = int(min(max(int(footprint * 1.5) + (4 << 20), 32 << 20),
                         64 << 20))        # cap: v7x physical VMEM per TC

    out, attn = pl.pallas_call(
        kernel,
        out_shape=out_shapes,
        grid_spec=pltpu.PrefetchScalarGridSpec(
            num_scalar_prefetch=0,
            grid=(num_head_blocks, num_q_tiles),
            in_specs=in_specs,
            out_specs=[out_spec, attn_spec],
        ),
        compiler_params=pltpu.CompilerParams(
            dimension_semantics=("parallel", "parallel"),
            vmem_limit_bytes=vmem_limit),
    )(*args)

    return out.reshape(B, H, L, Dk), attn.reshape(B, H, L, L)


# ---------------------------------------------------------------------------
# Pure-JAX reference (mirrors the PyTorch forward)
# ---------------------------------------------------------------------------

def _reference(q, k, v, scale, mask=None):
    s = jnp.einsum("bhld,bhmd->bhlm", q, k) / scale
    if mask is not None:
        s = jnp.where(mask == 0, -1e9, s)
    p = jax.nn.softmax(s, axis=-1)
    o = jnp.einsum("bhlm,bhmd->bhld", p, v)
    return o, p


if __name__ == "__main__":
    def _check(a, b, atol, rtol):
        err = float(jnp.max(jnp.abs(a - b)))
        assert jnp.allclose(a, b, atol=atol, rtol=rtol), f"max abs err {err}"

    keys = jax.random.split(jax.random.PRNGKey(0), 6)

    # --- Tests 1 & 2: canonical small shape, unmasked + causal mask ---------
    B, H, L, Dk = 2, 4, 8, 32
    scale = float(Dk) ** 0.5
    q = jax.random.normal(keys[0], (B, H, L, Dk), dtype=jnp.float32)
    k = jax.random.normal(keys[1], (B, H, L, Dk), dtype=jnp.float32)
    v = jax.random.normal(keys[2], (B, H, L, Dk), dtype=jnp.float32)

    out, attn = scaled_dot_product_attention(q, k, v, scale)
    jax.block_until_ready((out, attn))
    out_r, attn_r = _reference(q, k, v, scale)
    _check(out, out_r, 2e-3, 2e-3)
    _check(attn, attn_r, 2e-3, 2e-3)

    causal = jnp.tril(jnp.ones((L, L), dtype=jnp.int32))[None, None]
    out_m, attn_m = scaled_dot_product_attention(q, k, v, scale, mask=causal)
    jax.block_until_ready((out_m, attn_m))
    out_mr, attn_mr = _reference(q, k, v, scale, mask=causal)
    _check(out_m, out_mr, 2e-3, 2e-3)
    _check(attn_m, attn_mr, 2e-3, 2e-3)

    # --- Test 3: exercise the multi-tile grid (q-tiling + head grouping) ----
    B2, H2, L2, D2 = 2, 2, 128, 32
    scale2 = float(D2) ** 0.5
    q2 = jax.random.normal(keys[3], (B2, H2, L2, D2), dtype=jnp.float32)
    k2 = jax.random.normal(keys[4], (B2, H2, L2, D2), dtype=jnp.float32)
    v2 = jax.random.normal(keys[5], (B2, H2, L2, D2), dtype=jnp.float32)
    causal2 = jnp.tril(jnp.ones((L2, L2), dtype=jnp.int32))[None, None]
    out2, attn2 = scaled_dot_product_attention(
        q2, k2, v2, scale2, mask=causal2,
        max_heads_per_block=1, max_q_tile=64)      # force TH < H and L//TQ > 1
    jax.block_until_ready((out2, attn2))
    out2_r, attn2_r = _reference(q2, k2, v2, scale2, mask=causal2)
    _check(out2, out2_r, 1e-2, 1e-2)
    _check(attn2, attn2_r, 1e-2, 1e-2)

    print("KERNEL_OK")
</pallas_src>

<mosaic_0001>
module attributes {stable_mosaic.version = 11 : i64} {
  func.func @_attn_kernel(%arg0: i32, %arg1: i32, %arg2: memref<8x8x32xf32, #tpu.memory_space<vmem>>, %arg3: memref<8x8x32xf32, #tpu.memory_space<vmem>>, %arg4: memref<8x8x32xf32, #tpu.memory_space<vmem>>, %arg5: memref<8x8x32xf32, #tpu.memory_space<vmem>>, %arg6: memref<8x8x8xf32, #tpu.memory_space<vmem>>) attributes {dimension_semantics = [#tpu.dimension_semantics<parallel>, #tpu.dimension_semantics<parallel>], iteration_bounds = array<i64: 1, 1>, scalar_prefetch = 0 : i64, scratch_operands = 0 : i64, tpu.core_type = #tpu.core_type<tc>, window_params = [{transform_indices = @transform_0, window_bounds = array<i64: 8, 8, 32>}, {transform_indices = @transform_1, window_bounds = array<i64: 8, 8, 32>}, {transform_indices = @transform_2, window_bounds = array<i64: 8, 8, 32>}, {transform_indices = @transform_3, window_bounds = array<i64: 8, 8, 32>}, {transform_indices = @transform_4, window_bounds = array<i64: 8, 8, 8>}]} {
    %c0 = arith.constant 0 : index
    %c0_0 = arith.constant 0 : index
    %c0_1 = arith.constant 0 : index
    %0 = vector.load %arg2[%c0, %c0_0, %c0_1] : memref<8x8x32xf32, #tpu.memory_space<vmem>>, vector<8x8x32xf32>
    %cst = arith.constant 0.176776692 : f32
    %1 = vector.broadcast %cst : f32 to vector<8x8x32xf32>
    %2 = arith.mulf %0, %1 : vector<8x8x32xf32>
    %c0_2 = arith.constant 0 : index
    %c0_3 = arith.constant 0 : index
    %c0_4 = arith.constant 0 : index
    %3 = vector.load %arg3[%c0_2, %c0_3, %c0_4] : memref<8x8x32xf32, #tpu.memory_space<vmem>>, vector<8x8x32xf32>
    %c0_5 = arith.constant 0 : index
    %c0_6 = arith.constant 0 : index
    %c0_7 = arith.constant 0 : index
    %4 = vector.load %arg4[%c0_5, %c0_6, %c0_7] : memref<8x8x32xf32, #tpu.memory_space<vmem>>, vector<8x8x32xf32>
    "tpu.trace_start"() <{level = 10 : i32, message = "hqd,hkd->hqk"}> : () -> ()
    %cst_8 = arith.constant dense<0.000000e+00> : vector<8x8x8xf32>
    %5 = tpu.matmul %2, %3, %cst_8 {dimension_numbers = #tpu.dot_dimension_numbers<[2], [2], [1], [1], [0, 0, 0, 1, 1, 1], [0], [0]>} : vector<8x8x32xf32>, vector<8x8x32xf32>, vector<8x8x8xf32> -> vector<8x8x8xf32>
    "tpu.trace_stop"() : () -> ()
    %cst_9 = arith.constant dense<0xFF800000> : vector<8x8xf32>
    %6 = vector.multi_reduction <maximumf>, %5, %cst_9 [2] : vector<8x8x8xf32> to vector<8x8xf32>
    %7 = vector.shape_cast %6 : vector<8x8xf32> to vector<8x8x1xf32>
    %8 = vector.broadcast %7 : vector<8x8x1xf32> to vector<8x8x8xf32>
    %9 = arith.subf %5, %8 : vector<8x8x8xf32>
    %10 = math.exp %9 : vector<8x8x8xf32>
    %cst_10 = arith.constant dense<0.000000e+00> : vector<8x8xf32>
    %11 = vector.multi_reduction <add>, %10, %cst_10 [2] : vector<8x8x8xf32> to vector<8x8xf32>
    %12 = vector.shape_cast %11 : vector<8x8xf32> to vector<8x8x1xf32>
    %cst_11 = arith.constant 1.000000e+00 : f32
    %13 = vector.broadcast %cst_11 : f32 to vector<8x8x1xf32>
    %14 = arith.divf %13, %12 : vector<8x8x1xf32>
    %15 = vector.broadcast %14 : vector<8x8x1xf32> to vector<8x8x8xf32>
    %16 = arith.mulf %10, %15 : vector<8x8x8xf32>
    %c0_12 = arith.constant 0 : index
    %c0_13 = arith.constant 0 : index
    %c0_14 = arith.constant 0 : index
    %17 = vector.load %arg6[%c0_12, %c0_13, %c0_14] : memref<8x8x8xf32, #tpu.memory_space<vmem>>, vector<8x8x8xf32>
    tpu.vector_store %arg6[%c0_12, %c0_13, %c0_14], %16 {strides = array<i32>} : memref<8x8x8xf32, #tpu.memory_space<vmem>>, vector<8x8x8xf32>,
    "tpu.trace_start"() <{level = 10 : i32, message = "hqk,hkd->hqd"}> : () -> ()
    %cst_15 = arith.constant dense<0.000000e+00> : vector<8x8x32xf32>
    %18 = tpu.matmul %16, %4, %cst_15 {dimension_numbers = #tpu.dot_dimension_numbers<[2], [1], [1], [2], [0, 0, 0, 1, 1, 2], [0], [0]>} : vector<8x8x8xf32>, vector<8x8x32xf32>, vector<8x8x32xf32> -> vector<8x8x32xf32>
    "tpu.trace_stop"() : () -> ()
    %c0_16 = arith.constant 0 : index
    %c0_17 = arith.constant 0 : index
    %c0_18 = arith.constant 0 : index
    %19 = vector.load %arg5[%c0_16, %c0_17, %c0_18] : memref<8x8x32xf32, #tpu.memory_space<vmem>>, vector<8x8x32xf32>
    tpu.vector_store %arg5[%c0_16, %c0_17, %c0_18], %18 {strides = array<i32>} : memref<8x8x32xf32, #tpu.memory_space<vmem>>, vector<8x8x32xf32>,
    return
  }
  func.func @transform_0(%arg0: i32, %arg1: i32) -> (i32, i32, i32) {
    %c0_i32 = arith.constant 0 : i32
    %c0_i32_0 = arith.constant 0 : i32
    return %arg0, %arg1, %c0_i32 : i32, i32, i32
  }
  func.func @transform_1(%arg0: i32, %arg1: i32) -> (i32, i32, i32) {
    %c0_i32 = arith.constant 0 : i32
    %c0_i32_0 = arith.constant 0 : i32
    %c0_i32_1 = arith.constant 0 : i32
    return %arg0, %c0_i32, %c0_i32_0 : i32, i32, i32
  }
  func.func @transform_2(%arg0: i32, %arg1: i32) -> (i32, i32, i32) {
    %c0_i32 = arith.constant 0 : i32
    %c0_i32_0 = arith.constant 0 : i32
    %c0_i32_1 = arith.constant 0 : i32
    return %arg0, %c0_i32, %c0_i32_0 : i32, i32, i32
  }
  func.func @transform_3(%arg0: i32, %arg1: i32) -> (i32, i32, i32) {
    %c0_i32 = arith.constant 0 : i32
    %c0_i32_0 = arith.constant 0 : i32
    return %arg0, %arg1, %c0_i32 : i32, i32, i32
  }
  func.func @transform_4(%arg0: i32, %arg1: i32) -> (i32, i32, i32) {
    %c0_i32 = arith.constant 0 : i32
    %c0_i32_0 = arith.constant 0 : i32
    return %arg0, %arg1, %c0_i32 : i32, i32, i32
  }
}

</mosaic_0001>

<llo_original>
// kernel: tpu_custom_call.1
$region0: #{tpu_custom_call.1}
  #allocation0 [shape = 'u32[]', space=smem, size = 0x4, offset = 0x4, fixed_abs, tag = 'smem constant byte address 0x4 - core index']
  #allocation1 [shape = 'u32[144,128]{1,0:T(1,128)}', space=vmem, size = 0x12000, scoped, tag = 'internal scratch']
  %s0 = inlined_call_operand.hbm [shape: f32[8,8,32], index: 0, kind: input, shape index: {}]
  %s1 = inlined_call_operand.hbm [shape: f32[8,8,32], index: 1, kind: input, shape index: {}]
  %s2 = inlined_call_operand.hbm [shape: f32[8,8,32], index: 2, kind: input, shape index: {}]
  %s3 = inlined_call_operand.hbm [shape: f32[8,8,32], index: 3, kind: output, shape index: {0}]
  %s4 = inlined_call_operand.hbm [shape: f32[8,8,8], index: 4, kind: output, shape index: {1}]
  %5 = xla_tuple %s3, %s4
  %s6 = sld [smem:[#allocation0]]
  $region42: #{tpu_custom_call.1} parent=0
    _
  %s8 = ssub.s32 1, %s6
  %s9 = scalar_select 0, %s8, %s6
  $region1: #{tpu_custom_call.1} parent=0
    #allocation2 [shape = 'u8[32768]{0}', space=vmem, size = 0x8000, scoped, tag = 'input window, operand 0, single buffered']
    #allocation3 [shape = 's32[1]{0}', space=sflag, size = 0x4, scoped, tag = 'scoped memory for tpu_custom_call.1']
    #allocation4 [shape = 's32[1]{0}', space=sflag, size = 0x4, scoped, tag = 'scoped memory for tpu_custom_call.1']
    #allocation5 [shape = 'u8[32768]{0}', space=vmem, size = 0x8000, scoped, tag = 'input window, operand 1, single buffered']
    #allocation6 [shape = 's32[1]{0}', space=sflag, size = 0x4, scoped, tag = 'scoped memory for tpu_custom_call.1']
    #allocation7 [shape = 'u8[32768]{0}', space=vmem, size = 0x8000, scoped, tag = 'input window, operand 2, single buffered']
    #allocation8 [shape = 'u8[32768]{0}', space=vmem, size = 0x8000, scoped, tag = 'output window, operand 0, single buffered']
    #allocation9 [shape = 'u8[32768]{0}', space=vmem, size = 0x8000, scoped, tag = 'output window, operand 1, single buffered']
    #allocation10 [shape = 's32[1]{0}', space=sflag, size = 0x4, scoped, tag = 'scoped memory for tpu_custom_call.1']
    %10 = vsyncpa [#allocation3], 0
    %11 = vsyncpa [#allocation6], 0
    %12 = vsyncpa [#allocation4], 0
    %13 = vsyncpa [#allocation10], 0
    // Predicated region
    $region2: #{tpu_custom_call.1} parent=1 // pred_check
      _
    $region3: #{tpu_custom_call.1} parent=1 // pred_check_branch
      %15 = sbr.rel (0) target = $region5
    $region4: #{tpu_custom_call.1} parent=1 // pred_region
      %s17 = ssub.s32 1024, 1024
      %18 = vsyncadd [#allocation3], %s17
      %s19 = sshll.u32 [#allocation2], 4
      %s20 = int_to_ptr.vmem [resolvable:$true] %s19
      %25 = dma.hbm_to_vmem [thread:$0]  %s0, 1024, %s20, [#allocation3], 128, 128, 8
    $region5: #{tpu_custom_call.1} parent=1 // pred_fallthru
      _
    // Predicated region
    $region6: #{tpu_custom_call.1} parent=1 // pred_check
      _
    $region7: #{tpu_custom_call.1} parent=1 // pred_check_branch
      %27 = sbr.rel (0) target = $region9
    $region8: #{tpu_custom_call.1} parent=1 // pred_region
      %s29 = ssub.s32 1024, 1024
      %30 = vsyncadd [#allocation6], %s29
      %s31 = sshll.u32 [#allocation5], 4
      %s32 = int_to_ptr.vmem [resolvable:$true] %s31
      %37 = dma.hbm_to_vmem [thread:$0]  %s1, 1024, %s32, [#allocation6], 128, 128, 8
    $region9: #{tpu_custom_call.1} parent=1 // pred_fallthru
      _
    // Predicated region
    $region10: #{tpu_custom_call.1} parent=1 // pred_check
      _
    $region11: #{tpu_custom_call.1} parent=1 // pred_check_branch
      %39 = sbr.rel (0) target = $region13
    $region12: #{tpu_custom_call.1} parent=1 // pred_region
      %s41 = ssub.s32 1024, 1024
      %42 = vsyncadd [#allocation6], %s41
      %s43 = sshll.u32 [#allocation7], 4
      %s44 = int_to_ptr.vmem [resolvable:$true] %s43
      %49 = dma.hbm_to_vmem [thread:$0]  %s2, 1024, %s44, [#allocation6], 128, 128, 8
    $region13: #{tpu_custom_call.1} parent=1 // pred_fallthru
      _
    // Predicated region
    $region14: #{tpu_custom_call.1} parent=1 // pred_check
      _
    $region15: #{tpu_custom_call.1} parent=1 // pred_check_branch
      %51 = sbr.rel (0) target = $region17
    $region16: #{tpu_custom_call.1} parent=1 // pred_region
      %52 = dma.done [#allocation3], 1024
    $region17: #{tpu_custom_call.1} parent=1 // pred_fallthru
      _
    // Predicated region
    $region18: #{tpu_custom_call.1} parent=1 // pred_check
      _
    $region19: #{tpu_custom_call.1} parent=1 // pred_check_branch
      %54 = sbr.rel (0) target = $region21
    $region20: #{tpu_custom_call.1} parent=1 // pred_region
      %55 = dma.done [#allocation6], 1024
    $region21: #{tpu_custom_call.1} parent=1 // pred_fallthru
      _
    // Predicated region
    $region22: #{tpu_custom_call.1} parent=1 // pred_check
      _
    $region23: #{tpu_custom_call.1} parent=1 // pred_check_branch
      %57 = sbr.rel (0) target = $region25
    $region24: #{tpu_custom_call.1} parent=1 // pred_region
      %58 = dma.done [#allocation6], 1024
    $region25: #{tpu_custom_call.1} parent=1 // pred_fallthru
      _
    %v59 = vld [vmem:[#allocation2] sm:$0xff]
    %v60 = vld [vmem:[#allocation2 + $0x8] sm:$0xff]
    %v61 = vld [vmem:[#allocation2 + $0x10] sm:$0xff]
    %v62 = vld [vmem:[#allocation2 + $0x18] sm:$0xff]
    %v63 = vld [vmem:[#allocation2 + $0x20] sm:$0xff]
    %v64 = vld [vmem:[#allocation2 + $0x28] sm:$0xff]
    %v65 = vld [vmem:[#allocation2 + $0x30] sm:$0xff]
    %v66 = vld [vmem:[#allocation2 + $0x38] sm:$0xff]
    %v67 = vmul.f32 %v59, 0.17677669
    %v68 = vmul.f32 %v60, 0.17677669
    %v69 = vmul.f32 %v61, 0.17677669
    %v70 = vmul.f32 %v62, 0.17677669
    %v71 = vmul.f32 %v63, 0.17677669
    %v72 = vmul.f32 %v64, 0.17677669
    %v73 = vmul.f32 %v65, 0.17677669
    %v74 = vmul.f32 %v66, 0.17677669
    %v75 = vld [vmem:[#allocation5] sm:$0xff]
    %v76 = vld [vmem:[#allocation5 + $0x8] sm:$0xff]
    %v77 = vld [vmem:[#allocation5 + $0x10] sm:$0xff]
    %v78 = vld [vmem:[#allocation5 + $0x18] sm:$0xff]
    %v79 = vld [vmem:[#allocation5 + $0x20] sm:$0xff]
    %v80 = vld [vmem:[#allocation5 + $0x28] sm:$0xff]
    %v81 = vld [vmem:[#allocation5 + $0x30] sm:$0xff]
    %v82 = vld [vmem:[#allocation5 + $0x38] sm:$0xff]
    %v83 = vld [vmem:[#allocation7] sm:$0xff]
    %v84 = vld [vmem:[#allocation7 + $0x8] sm:$0xff]
    %v85 = vld [vmem:[#allocation7 + $0x10] sm:$0xff]
    %v86 = vld [vmem:[#allocation7 + $0x18] sm:$0xff]
    %v87 = vld [vmem:[#allocation7 + $0x20] sm:$0xff]
    %v88 = vld [vmem:[#allocation7 + $0x28] sm:$0xff]
    %v89 = vld [vmem:[#allocation7 + $0x30] sm:$0xff]
    %v90 = vld [vmem:[#allocation7 + $0x38] sm:$0xff]
    %vm91 = vcmask 261120
    %v93 = vsel %vm91, %v67, 0
    %v96 = vsel %vm91, %v75, 0
    %98 = vmatprep.subr.mxu0 0.0
    %99 = vmatpush1.xpose.msra.mxu0 0.0
    %100 = vmatprep.subr.mxu0 0.0
    %101 = vmatpush1.xpose.msra.mxu0 0.0
    %102 = vmatprep.subr.mxu0 0.0
    %103 = vmatpush1.xpose.msra.mxu0 0.0
    %104 = vmatprep.subr.mxu0 0.0
    %105 = vmatpush1.xpose.msra.mxu0 0.0
    %106 = vmatprep.subr.mxu0 0.0
    %107 = vmatpush1.xpose.msra.mxu0 0.0
    %108 = vmatprep.subr.mxu0 0.0
    %109 = vmatpush1.xpose.msra.mxu0 0.0
    %110 = vmatprep.subr.mxu0 0.0
    %111 = vmatpush1.xpose.msra.mxu0 0.0
    %112 = vmatprep.subr.mxu0 0.0
    %113 = vmatpush1.xpose.msra.mxu0 0.0
    %114 = vmatprep.subr.mxu0 0.0
    %115 = vmatpush1.xpose.msra.mxu0 0.0
    %116 = vmatprep.subr.mxu0 0.0
    %117 = vmatpush1.xpose.msra.mxu0 0.0
    %118 = vmatprep.subr.mxu0 0.0
    %119 = vmatpush1.xpose.msra.mxu0 0.0
    %120 = vmatprep.subr.mxu0 0.0
    %121 = vmatpush1.xpose.msra.mxu0 0.0
    %122 = vmatprep.subr.mxu0 0.0
    %123 = vmatpush1.xpose.msra.mxu0 0.0
    %124 = vmatprep.subr.mxu0 0.0
    %125 = vmatpush1.xpose.msra.mxu0 0.0
    %126 = vmatprep.subr.mxu0 0.0
    %127 = vmatpush1.xpose.msra.mxu0 0.0
    %128 = vmatprep.subr.mxu0 0.0
    %129 = vmatpush1.xpose.msra.mxu0 %v96
    %130 = vmatprep.subr.mxu0 0.0
    %131 = vmatpush2.xpose.msra.mxu0 0.0
    %132 = vmatprep.subr.mxu0 0.0
    %133 = vmatpush2.xpose.msra.mxu0 0.0
    %134 = vmatprep.subr.mxu0 0.0
    %135 = vmatpush2.xpose.msra.mxu0 0.0
    %136 = vmatprep.subr.mxu0 0.0
    %137 = vmatpush2.xpose.msra.mxu0 0.0
    %138 = vmatprep.subr.mxu0 0.0
    %139 = vmatpush2.xpose.msra.mxu0 0.0
    %140 = vmatprep.subr.mxu0 0.0
    %141 = vmatpush2.xpose.msra.mxu0 0.0
    %142 = vmatprep.subr.mxu0 0.0
    %143 = vmatpush2.xpose.msra.mxu0 0.0
    %144 = vmatprep.subr.mxu0 0.0
    %145 = vmatpush2.xpose.msra.mxu0 0.0
    %146 = vmatprep.subr.mxu0 0.0
    %147 = vmatpush2.xpose.msra.mxu0 0.0
    %148 = vmatprep.subr.mxu0 0.0
    %149 = vmatpush2.xpose.msra.mxu0 0.0
    %150 = vmatprep.subr.mxu0 0.0
    %151 = vmatpush2.xpose.msra.mxu0 0.0
    %152 = vmatprep.subr.mxu0 0.0
    %153 = vmatpush2.xpose.msra.mxu0 0.0
    %154 = vmatprep.subr.mxu0 0.0
    %155 = vmatpush2.xpose.msra.mxu0 0.0
    %156 = vmatprep.subr.mxu0 0.0
    %157 = vmatpush2.xpose.msra.mxu0 0.0
    %158 = vmatprep.subr.mxu0 0.0
    %159 = vmatpush2.xpose.msra.mxu0 0.0
    %160 = vmatprep.subr.mxu0 0.0
    %161 = vmatpush2.xpose.msra.mxu0 0.0
    %162 = vmatprep.mubr.f32.mxu0 0.0
    %163 = vmatmul.mubr.f32.gmra.mxu0 %v93
    %v164 = vpop.f32.mrf.mxu0
    %v165 = vadd.f32 0.0, %v164
    %v166 = vpop.f32.mrf.mxu0
    %167 = vdwg.mxu0
    %v169 = vsel %vm91, %v68, 0
    %v172 = vsel %vm91, %v76, 0
    %174 = vmatprep.subr.mxu0 0.0
    %175 = vmatpush1.xpose.msra.mxu0 0.0
    %176 = vmatprep.subr.mxu0 0.0
    %177 = vmatpush1.xpose.msra.mxu0 0.0
    %178 = vmatprep.subr.mxu0 0.0
    %179 = vmatpush1.xpose.msra.mxu0 0.0
    %180 = vmatprep.subr.mxu0 0.0
    %181 = vmatpush1.xpose.msra.mxu0 0.0
    %182 = vmatprep.subr.mxu0 0.0
    %183 = vmatpush1.xpose.msra.mxu0 0.0
    %184 = vmatprep.subr.mxu0 0.0
    %185 = vmatpush1.xpose.msra.mxu0 0.0
    %186 = vmatprep.subr.mxu0 0.0
    %187 = vmatpush1.xpose.msra.mxu0 0.0
    %188 = vmatprep.subr.mxu0 0.0
    %189 = vmatpush1.xpose.msra.mxu0 0.0
    %190 = vmatprep.subr.mxu0 0.0
    %191 = vmatpush1.xpose.msra.mxu0 0.0
    %192 = vmatprep.subr.mxu0 0.0
    %193 = vmatpush1.xpose.msra.mxu0 0.0
    %194 = vmatprep.subr.mxu0 0.0
    %195 = vmatpush1.xpose.msra.mxu0 0.0
    %196 = vmatprep.subr.mxu0 0.0
    %197 = vmatpush1.xpose.msra.mxu0 0.0
    %198 = vmatprep.subr.mxu0 0.0
    %199 = vmatpush1.xpose.msra.mxu0 0.0
    %200 = vmatprep.subr.mxu0 0.0
    %201 = vmatpush1.xpose.msra.mxu0 0.0
    %202 = vmatprep.subr.mxu0 0.0
    %203 = vmatpush1.xpose.msra.mxu0 0.0
    %204 = vmatprep.subr.mxu0 0.0
    %205 = vmatpush1.xpose.msra.mxu0 %v172
    %206 = vmatprep.subr.mxu0 0.0
    %207 = vmatpush2.xpose.msra.mxu0 0.0
    %208 = vmatprep.subr.mxu0 0.0
    %209 = vmatpush2.xpose.msra.mxu0 0.0
    %210 = vmatprep.subr.mxu0 0.0
    %211 = vmatpush2.xpose.msra.mxu0 0.0
    %212 = vmatprep.subr.mxu0 0.0
    %213 = vmatpush2.xpose.msra.mxu0 0.0
    %214 = vmatprep.subr.mxu0 0.0
    %215 = vmatpush2.xpose.msra.mxu0 0.0
    %216 = vmatprep.subr.mxu0 0.0
    %217 = vmatpush2.xpose.msra.mxu0 0.0
    %218 = vmatprep.subr.mxu0 0.0
    %219 = vmatpush2.xpose.msra.mxu0 0.0
    %220 = vmatprep.subr.mxu0 0.0
    %221 = vmatpush2.xpose.msra.mxu0 0.0
    %222 = vmatprep.subr.mxu0 0.0
    %223 = vmatpush2.xpose.msra.mxu0 0.0
    %224 = vmatprep.subr.mxu0 0.0
    %225 = vmatpush2.xpose.msra.mxu0 0.0
    %226 = vmatprep.subr.mxu0 0.0
    %227 = vmatpush2.xpose.msra.mxu0 0.0
    %228 = vmatprep.subr.mxu0 0.0
    %229 = vmatpush2.xpose.msra.mxu0 0.0
    %230 = vmatprep.subr.mxu0 0.0
    %231 = vmatpush2.xpose.msra.mxu0 0.0
    %232 = vmatprep.subr.mxu0 0.0
    %233 = vmatpush2.xpose.msra.mxu0 0.0
    %234 = vmatprep.subr.mxu0 0.0
    %235 = vmatpush2.xpose.msra.mxu0 0.0
    %236 = vmatprep.subr.mxu0 0.0
    %237 = vmatpush2.xpose.msra.mxu0 0.0
    %238 = vmatprep.mubr.f32.mxu0 0.0
    %239 = vmatmul.mubr.f32.gmra.mxu0 %v169
    %v240 = vpop.f32.mrf.mxu0
    %v241 = vadd.f32 0.0, %v240
    %v242 = vpop.f32.mrf.mxu0
    %243 = vdwg.mxu0
    %v245 = vsel %vm91, %v69, 0
    %v248 = vsel %vm91, %v77, 0
    %250 = vmatprep.subr.mxu0 0.0
    %251 = vmatpush1.xpose.msra.mxu0 0.0
    %252 = vmatprep.subr.mxu0 0.0
    %253 = vmatpush1.xpose.msra.mxu0 0.0
    %254 = vmatprep.subr.mxu0 0.0
    %255 = vmatpush1.xpose.msra.mxu0 0.0
    %256 = vmatprep.subr.mxu0 0.0
    %257 = vmatpush1.xpose.msra.mxu0 0.0
    %258 = vmatprep.subr.mxu0 0.0
    %259 = vmatpush1.xpose.msra.mxu0 0.0
    %260 = vmatprep.subr.mxu0 0.0
    %261 = vmatpush1.xpose.msra.mxu0 0.0
    %262 = vmatprep.subr.mxu0 0.0
    %263 = vmatpush1.xpose.msra.mxu0 0.0
    %264 = vmatprep.subr.mxu0 0.0
    %265 = vmatpush1.xpose.msra.mxu0 0.0
    %266 = vmatprep.subr.mxu0 0.0
    %267 = vmatpush1.xpose.msra.mxu0 0.0
    %268 = vmatprep.subr.mxu0 0.0
    %269 = vmatpush1.xpose.msra.mxu0 0.0
    %270 = vmatprep.subr.mxu0 0.0
    %271 = vmatpush1.xpose.msra.mxu0 0.0
    %272 = vmatprep.subr.mxu0 0.0
    %273 = vmatpush1.xpose.msra.mxu0 0.0
    %274 = vmatprep.subr.mxu0 0.0
    %275 = vmatpush1.xpose.msra.mxu0 0.0
    %276 = vmatprep.subr.mxu0 0.0
    %277 = vmatpush1.xpose.msra.mxu0 0.0
    %278 = vmatprep.subr.mxu0 0.0
    %279 = vmatpush1.xpose.msra.mxu0 0.0
    %280 = vmatprep.subr.mxu0 0.0
    %281 = vmatpush1.xpose.msra.mxu0 %v248
    %282 = vmatprep.subr.mxu0 0.0
    %283 = vmatpush2.xpose.msra.mxu0 0.0
    %284 = vmatprep.subr.mxu0 0.0
    %285 = vmatpush2.xpose.msra.mxu0 0.0
    %286 = vmatprep.subr.mxu0 0.0
    %287 = vmatpush2.xpose.msra.mxu0 0.0
    %288 = vmatprep.subr.mxu0 0.0
    %289 = vmatpush2.xpose.msra.mxu0 0.0
    %290 = vmatprep.subr.mxu0 0.0
    %291 = vmatpush2.xpose.msra.mxu0 0.0
    %292 = vmatprep.subr.mxu0 0.0
    %293 = vmatpush2.xpose.msra.mxu0 0.0
    %294 = vmatprep.subr.mxu0 0.0
    %295 = vmatpush2.xpose.msra.mxu0 0.0
    %296 = vmatprep.subr.mxu0 0.0
    %297 = vmatpush2.xpose.msra.mxu0 0.0
    %298 = vmatprep.subr.mxu0 0.0
    %299 = vmatpush2.xpose.msra.mxu0 0.0
    %300 = vmatprep.subr.mxu0 0.0
    %301 = vmatpush2.xpose.msra.mxu0 0.0
    %302 = vmatprep.subr.mxu0 0.0
    %303 = vmatpush2.xpose.msra.mxu0 0.0
    %304 = vmatprep.subr.mxu0 0.0
    %305 = vmatpush2.xpose.msra.mxu0 0.0
    %306 = vmatprep.subr.mxu0 0.0
    %307 = vmatpush2.xpose.msra.mxu0 0.0
    %308 = vmatprep.subr.mxu0 0.0
    %309 = vmatpush2.xpose.msra.mxu0 0.0
    %310 = vmatprep.subr.mxu0 0.0
    %311 = vmatpush2.xpose.msra.mxu0 0.0
    %312 = vmatprep.subr.mxu0 0.0
    %313 = vmatpush2.xpose.msra.mxu0 0.0
    %314 = vmatprep.mubr.f32.mxu0 0.0
    %315 = vmatmul.mubr.f32.gmra.mxu0 %v245
    %v316 = vpop.f32.mrf.mxu0
    %v317 = vadd.f32 0.0, %v316
    %v318 = vpop.f32.mrf.mxu0
    %319 = vdwg.mxu0
    %v321 = vsel %vm91, %v70, 0
    %v324 = vsel %vm91, %v78, 0
    %326 = vmatprep.subr.mxu0 0.0
    %327 = vmatpush1.xpose.msra.mxu0 0.0
    %328 = vmatprep.subr.mxu0 0.0
    %329 = vmatpush1.xpose.msra.mxu0 0.0
    %330 = vmatprep.subr.mxu0 0.0
    %331 = vmatpush1.xpose.msra.mxu0 0.0
    %332 = vmatprep.subr.mxu0 0.0
    %333 = vmatpush1.xpose.msra.mxu0 0.0
    %334 = vmatprep.subr.mxu0 0.0
    %335 = vmatpush1.xpose.msra.mxu0 0.0
    %336 = vmatprep.subr.mxu0 0.0
    %337 = vmatpush1.xpose.msra.mxu0 0.0
    %338 = vmatprep.subr.mxu0 0.0
    %339 = vmatpush1.xpose.msra.mxu0 0.0
    %340 = vmatprep.subr.mxu0 0.0
    %341 = vmatpush1.xpose.msra.mxu0 0.0
    %342 = vmatprep.subr.mxu0 0.0
    %343 = vmatpush1.xpose.msra.mxu0 0.0
    %344 = vmatprep.subr.mxu0 0.0
    %345 = vmatpush1.xpose.msra.mxu0 0.0
    %346 = vmatprep.subr.mxu0 0.0
    %347 = vmatpush1.xpose.msra.mxu0 0.0
    %348 = vmatprep.subr.mxu0 0.0
    %349 = vmatpush1.xpose.msra.mxu0 0.0
    %350 = vmatprep.subr.mxu0 0.0
    %351 = vmatpush1.xpose.msra.mxu0 0.0
    %352 = vmatprep.subr.mxu0 0.0
    %353 = vmatpush1.xpose.msra.mxu0 0.0
    %354 = vmatprep.subr.mxu0 0.0
    %355 = vmatpush1.xpose.msra.mxu0 0.0
    %356 = vmatprep.subr.mxu0 0.0
    %357 = vmatpush1.xpose.msra.mxu0 %v324
    %358 = vmatprep.subr.mxu0 0.0
    %359 = vmatpush2.xpose.msra.mxu0 0.0
    %360 = vmatprep.subr.mxu0 0.0
    %361 = vmatpush2.xpose.msra.mxu0 0.0
    %362 = vmatprep.subr.mxu0 0.0
    %363 = vmatpush2.xpose.msra.mxu0 0.0
    %364 = vmatprep.subr.mxu0 0.0
    %365 = vmatpush2.xpose.msra.mxu0 0.0
    %366 = vmatprep.subr.mxu0 0.0
    %367 = vmatpush2.xpose.msra.mxu0 0.0
    %368 = vmatprep.subr.mxu0 0.0
    %369 = vmatpush2.xpose.msra.mxu0 0.0
    %370 = vmatprep.subr.mxu0 0.0
    %371 = vmatpush2.xpose.msra.mxu0 0.0
    %372 = vmatprep.subr.mxu0 0.0
    %373 = vmatpush2.xpose.msra.mxu0 0.0
    %374 = vmatprep.subr.mxu0 0.0
    %375 = vmatpush2.xpose.msra.mxu0 0.0
    %376 = vmatprep.subr.mxu0 0.0
    %377 = vmatpush2.xpose.msra.mxu0 0.0
    %378 = vmatprep.subr.mxu0 0.0
    %379 = vmatpush2.xpose.msra.mxu0 0.0
    %380 = vmatprep.subr.mxu0 0.0
    %381 = vmatpush2.xpose.msra.mxu0 0.0
    %382 = vmatprep.subr.mxu0 0.0
    %383 = vmatpush2.xpose.msra.mxu0 0.0
    %384 = vmatprep.subr.mxu0 0.0
    %385 = vmatpush2.xpose.msra.mxu0 0.0
    %386 = vmatprep.subr.mxu0 0.0
    %387 = vmatpush2.xpose.msra.mxu0 0.0
    %388 = vmatprep.subr.mxu0 0.0
    %389 = vmatpush2.xpose.msra.mxu0 0.0
    %390 = vmatprep.mubr.f32.mxu0 0.0
    %391 = vmatmul.mubr.f32.gmra.mxu0 %v321
    %v392 = vpop.f32.mrf.mxu0
    %v393 = vadd.f32 0.0, %v392
    %v394 = vpop.f32.mrf.mxu0
    %395 = vdwg.mxu0
    %v397 = vsel %vm91, %v71, 0
    %v400 = vsel %vm91, %v79, 0
    %402 = vmatprep.subr.mxu0 0.0
    %403 = vmatpush1.xpose.msra.mxu0 0.0
    %404 = vmatprep.subr.mxu0 0.0
    %405 = vmatpush1.xpose.msra.mxu0 0.0
    %406 = vmatprep.subr.mxu0 0.0
    %407 = vmatpush1.xpose.msra.mxu0 0.0
    %408 = vmatprep.subr.mxu0 0.0
    %409 = vmatpush1.xpose.msra.mxu0 0.0
    %410 = vmatprep.subr.mxu0 0.0
    %411 = vmatpush1.xpose.msra.mxu0 0.0
    %412 = vmatprep.subr.mxu0 0.0
    %413 = vmatpush1.xpose.msra.mxu0 0.0
    %414 = vmatprep.subr.mxu0 0.0
    %415 = vmatpush1.xpose.msra.mxu0 0.0
    %416 = vmatprep.subr.mxu0 0.0
    %417 = vmatpush1.xpose.msra.mxu0 0.0
    %418 = vmatprep.subr.mxu0 0.0
    %419 = vmatpush1.xpose.msra.mxu0 0.0
    %420 = vmatprep.subr.mxu0 0.0
    %421 = vmatpush1.xpose.msra.mxu0 0.0
    %422 = vmatprep.subr.mxu0 0.0
    %423 = vmatpush1.xpose.msra.mxu0 0.0
    %424 = vmatprep.subr.mxu0 0.0
    %425 = vmatpush1.xpose.msra.mxu0 0.0
    %426 = vmatprep.subr.mxu0 0.0
    %427 = vmatpush1.xpose.msra.mxu0 0.0
    %428 = vmatprep.subr.mxu0 0.0
    %429 = vmatpush1.xpose.msra.mxu0 0.0
    %430 = vmatprep.subr.mxu0 0.0
    %431 = vmatpush1.xpose.msra.mxu0 0.0
    %432 = vmatprep.subr.mxu0 0.0
    %433 = vmatpush1.xpose.msra.mxu0 %v400
    %434 = vmatprep.subr.mxu0 0.0
    %435 = vmatpush2.xpose.msra.mxu0 0.0
    %436 = vmatprep.subr.mxu0 0.0
    %437 = vmatpush2.xpose.msra.mxu0 0.0
    %438 = vmatprep.subr.mxu0 0.0
    %439 = vmatpush2.xpose.msra.mxu0 0.0
    %440 = vmatprep.subr.mxu0 0.0
    %441 = vmatpush2.xpose.msra.mxu0 0.0
    %442 = vmatprep.subr.mxu0 0.0
    %443 = vmatpush2.xpose.msra.mxu0 0.0
    %444 = vmatprep.subr.mxu0 0.0
    %445 = vmatpush2.xpose.msra.mxu0 0.0
    %446 = vmatprep.subr.mxu0 0.0
    %447 = vmatpush2.xpose.msra.mxu0 0.0
    %448 = vmatprep.subr.mxu0 0.0
    %449 = vmatpush2.xpose.msra.mxu0 0.0
    %450 = vmatprep.subr.mxu0 0.0
    %451 = vmatpush2.xpose.msra.mxu0 0.0
    %452 = vmatprep.subr.mxu0 0.0
    %453 = vmatpush2.xpose.msra.mxu0 0.0
    %454 = vmatprep.subr.mxu0 0.0
    %455 = vmatpush2.xpose.msra.mxu0 0.0
    %456 = vmatprep.subr.mxu0 0.0
    %457 = vmatpush2.xpose.msra.mxu0 0.0
    %458 = vmatprep.subr.mxu0 0.0
    %459 = vmatpush2.xpose.msra.mxu0 0.0
    %460 = vmatprep.subr.mxu0 0.0
    %461 = vmatpush2.xpose.msra.mxu0 0.0
    %462 = vmatprep.subr.mxu0 0.0
    %463 = vmatpush2.xpose.msra.mxu0 0.0
    %464 = vmatprep.subr.mxu0 0.0
    %465 = vmatpush2.xpose.msra.mxu0 0.0
    %466 = vmatprep.mubr.f32.mxu0 0.0
    %467 = vmatmul.mubr.f32.gmra.mxu0 %v397
    %v468 = vpop.f32.mrf.mxu0
    %v469 = vadd.f32 0.0, %v468
    %v470 = vpop.f32.mrf.mxu0
    %471 = vdwg.mxu0
    %v473 = vsel %vm91, %v72, 0
    %v476 = vsel %vm91, %v80, 0
    %478 = vmatprep.subr.mxu0 0.0
    %479 = vmatpush1.xpose.msra.mxu0 0.0
    %480 = vmatprep.subr.mxu0 0.0
    %481 = vmatpush1.xpose.msra.mxu0 0.0
    %482 = vmatprep.subr.mxu0 0.0
    %483 = vmatpush1.xpose.msra.mxu0 0.0
    %484 = vmatprep.subr.mxu0 0.0
    %485 = vmatpush1.xpose.msra.mxu0 0.0
    %486 = vmatprep.subr.mxu0 0.0
    %487 = vmatpush1.xpose.msra.mxu0 0.0
    %488 = vmatprep.subr.mxu0 0.0
    %489 = vmatpush1.xpose.msra.mxu0 0.0
    %490 = vmatprep.subr.mxu0 0.0
    %491 = vmatpush1.xpose.msra.mxu0 0.0
    %492 = vmatprep.subr.mxu0 0.0
    %493 = vmatpush1.xpose.msra.mxu0 0.0
    %494 = vmatprep.subr.mxu0 0.0
    %495 = vmatpush1.xpose.msra.mxu0 0.0
    %496 = vmatprep.subr.mxu0 0.0
    %497 = vmatpush1.xpose.msra.mxu0 0.0
    %498 = vmatprep.subr.mxu0 0.0
    %499 = vmatpush1.xpose.msra.mxu0 0.0
    %500 = vmatprep.subr.mxu0 0.0
    %501 = vmatpush1.xpose.msra.mxu0 0.0
    %502 = vmatprep.subr.mxu0 0.0
    %503 = vmatpush1.xpose.msra.mxu0 0.0
    %504 = vmatprep.subr.mxu0 0.0
    %505 = vmatpush1.xpose.msra.mxu0 0.0
    %506 = vmatprep.subr.mxu0 0.0
    %507 = vmatpush1.xpose.msra.mxu0 0.0
    %508 = vmatprep.subr.mxu0 0.0
    %509 = vmatpush1.xpose.msra.mxu0 %v476
    %510 = vmatprep.subr.mxu0 0.0
    %511 = vmatpush2.xpose.msra.mxu0 0.0
    %512 = vmatprep.subr.mxu0 0.0
    %513 = vmatpush2.xpose.msra.mxu0 0.0
    %514 = vmatprep.subr.mxu0 0.0
    %515 = vmatpush2.xpose.msra.mxu0 0.0
    %516 = vmatprep.subr.mxu0 0.0
    %517 = vmatpush2.xpose.msra.mxu0 0.0
    %518 = vmatprep.subr.mxu0 0.0
    %519 = vmatpush2.xpose.msra.mxu0 0.0
    %520 = vmatprep.subr.mxu0 0.0
    %521 = vmatpush2.xpose.msra.mxu0 0.0
    %522 = vmatprep.subr.mxu0 0.0
    %523 = vmatpush2.xpose.msra.mxu0 0.0
    %524 = vmatprep.subr.mxu0 0.0
    %525 = vmatpush2.xpose.msra.mxu0 0.0
    %526 = vmatprep.subr.mxu0 0.0
    %527 = vmatpush2.xpose.msra.mxu0 0.0
    %528 = vmatprep.subr.mxu0 0.0
    %529 = vmatpush2.xpose.msra.mxu0 0.0
    %530 = vmatprep.subr.mxu0 0.0
    %531 = vmatpush2.xpose.msra.mxu0 0.0
    %532 = vmatprep.subr.mxu0 0.0
    %533 = vmatpush2.xpose.msra.mxu0 0.0
    %534 = vmatprep.subr.mxu0 0.0
    %535 = vmatpush2.xpose.msra.mxu0 0.0
    %536 = vmatprep.subr.mxu0 0.0
    %537 = vmatpush2.xpose.msra.mxu0 0.0
    %538 = vmatprep.subr.mxu0 0.0
    %539 = vmatpush2.xpose.msra.mxu0 0.0
    %540 = vmatprep.subr.mxu0 0.0
    %541 = vmatpush2.xpose.msra.mxu0 0.0
    %542 = vmatprep.mubr.f32.mxu0 0.0
    %543 = vmatmul.mubr.f32.gmra.mxu0 %v473
    %v544 = vpop.f32.mrf.mxu0
    %v545 = vadd.f32 0.0, %v544
    %v546 = vpop.f32.mrf.mxu0
    %547 = vdwg.mxu0
    %v549 = vsel %vm91, %v73, 0
    %v552 = vsel %vm91, %v81, 0
    %554 = vmatprep.subr.mxu0 0.0
    %555 = vmatpush1.xpose.msra.mxu0 0.0
    %556 = vmatprep.subr.mxu0 0.0
    %557 = vmatpush1.xpose.msra.mxu0 0.0
    %558 = vmatprep.subr.mxu0 0.0
    %559 = vmatpush1.xpose.msra.mxu0 0.0
    %560 = vmatprep.subr.mxu0 0.0
    %561 = vmatpush1.xpose.msra.mxu0 0.0
    %562 = vmatprep.subr.mxu0 0.0
    %563 = vmatpush1.xpose.msra.mxu0 0.0
    %564 = vmatprep.subr.mxu0 0.0
    %565 = vmatpush1.xpose.msra.mxu0 0.0
    %566 = vmatprep.subr.mxu0 0.0
    %567 = vmatpush1.xpose.msra.mxu0 0.0
    %568 = vmatprep.subr.mxu0 0.0
    %569 = vmatpush1.xpose.msra.mxu0 0.0
    %570 = vmatprep.subr.mxu0 0.0
    %571 = vmatpush1.xpose.msra.mxu0 0.0
    %572 = vmatprep.subr.mxu0 0.0
    %573 = vmatpush1.xpose.msra.mxu0 0.0
    %574 = vmatprep.subr.mxu0 0.0
    %575 = vmatpush1.xpose.msra.mxu0 0.0
    %576 = vmatprep.subr.mxu0 0.0
    %577 = vmatpush1.xpose.msra.mxu0 0.0
    %578 = vmatprep.subr.mxu0 0.0
    %579 = vmatpush1.xpose.msra.mxu0 0.0
    %580 = vmatprep.subr.mxu0 0.0
    %581 = vmatpush1.xpose.msra.mxu0 0.0
    %582 = vmatprep.subr.mxu0 0.0
    %583 = vmatpush1.xpose.msra.mxu0 0.0
    %584 = vmatprep.subr.mxu0 0.0
    %585 = vmatpush1.xpose.msra.mxu0 %v552
    %586 = vmatprep.subr.mxu0 0.0
    %587 = vmatpush2.xpose.msra.mxu0 0.0
    %588 = vmatprep.subr.mxu0 0.0
    %589 = vmatpush2.xpose.msra.mxu0 0.0
    %590 = vmatprep.subr.mxu0 0.0
    %591 = vmatpush2.xpose.msra.mxu0 0.0
    %592 = vmatprep.subr.mxu0 0.0
    %593 = vmatpush2.xpose.msra.mxu0 0.0
    %594 = vmatprep.subr.mxu0 0.0
    %595 = vmatpush2.xpose.msra.mxu0 0.0
    %596 = vmatprep.subr.mxu0 0.0
    %597 = vmatpush2.xpose.msra.mxu0 0.0
    %598 = vmatprep.subr.mxu0 0.0
    %599 = vmatpush2.xpose.msra.mxu0 0.0
    %600 = vmatprep.subr.mxu0 0.0
    %601 = vmatpush2.xpose.msra.mxu0 0.0
    %602 = vmatprep.subr.mxu0 0.0
    %603 = vmatpush2.xpose.msra.mxu0 0.0
    %604 = vmatprep.subr.mxu0 0.0
    %605 = vmatpush2.xpose.msra.mxu0 0.0
    %606 = vmatprep.subr.mxu0 0.0
    %607 = vmatpush2.xpose.msra.mxu0 0.0
    %608 = vmatprep.subr.mxu0 0.0
    %609 = vmatpush2.xpose.msra.mxu0 0.0
    %610 = vmatprep.subr.mxu0 0.0
    %611 = vmatpush2.xpose.msra.mxu0 0.0
    %612 = vmatprep.subr.mxu0 0.0
    %613 = vmatpush2.xpose.msra.mxu0 0.0
    %614 = vmatprep.subr.mxu0 0.0
    %615 = vmatpush2.xpose.msra.mxu0 0.0
    %616 = vmatprep.subr.mxu0 0.0
    %617 = vmatpush2.xpose.msra.mxu0 0.0
    %618 = vmatprep.mubr.f32.mxu0 0.0
    %619 = vmatmul.mubr.f32.gmra.mxu0 %v549
    %v620 = vpop.f32.mrf.mxu0
    %v621 = vadd.f32 0.0, %v620
    %v622 = vpop.f32.mrf.mxu0
    %623 = vdwg.mxu0
    %v625 = vsel %vm91, %v74, 0
    %v628 = vsel %vm91, %v82, 0
    %630 = vmatprep.subr.mxu0 0.0
    %631 = vmatpush1.xpose.msra.mxu0 0.0
    %632 = vmatprep.subr.mxu0 0.0
    %633 = vmatpush1.xpose.msra.mxu0 0.0
    %634 = vmatprep.subr.mxu0 0.0
    %635 = vmatpush1.xpose.msra.mxu0 0.0
    %636 = vmatprep.subr.mxu0 0.0
    %637 = vmatpush1.xpose.msra.mxu0 0.0
    %638 = vmatprep.subr.mxu0 0.0
    %639 = vmatpush1.xpose.msra.mxu0 0.0
    %640 = vmatprep.subr.mxu0 0.0
    %641 = vmatpush1.xpose.msra.mxu0 0.0
    %642 = vmatprep.subr.mxu0 0.0
    %643 = vmatpush1.xpose.msra.mxu0 0.0
    %644 = vmatprep.subr.mxu0 0.0
    %645 = vmatpush1.xpose.msra.mxu0 0.0
    %646 = vmatprep.subr.mxu0 0.0
    %647 = vmatpush1.xpose.msra.mxu0 0.0
    %648 = vmatprep.subr.mxu0 0.0
    %649 = vmatpush1.xpose.msra.mxu0 0.0
    %650 = vmatprep.subr.mxu0 0.0
    %651 = vmatpush1.xpose.msra.mxu0 0.0
    %652 = vmatprep.subr.mxu0 0.0
    %653 = vmatpush1.xpose.msra.mxu0 0.0
    %654 = vmatprep.subr.mxu0 0.0
    %655 = vmatpush1.xpose.msra.mxu0 0.0
    %656 = vmatprep.subr.mxu0 0.0
    %657 = vmatpush1.xpose.msra.mxu0 0.0
    %658 = vmatprep.subr.mxu0 0.0
    %659 = vmatpush1.xpose.msra.mxu0 0.0
    %660 = vmatprep.subr.mxu0 0.0
    %661 = vmatpush1.xpose.msra.mxu0 %v628
    %662 = vmatprep.subr.mxu0 0.0
    %663 = vmatpush2.xpose.msra.mxu0 0.0
    %664 = vmatprep.subr.mxu0 0.0
    %665 = vmatpush2.xpose.msra.mxu0 0.0
    %666 = vmatprep.subr.mxu0 0.0
    %667 = vmatpush2.xpose.msra.mxu0 0.0
    %668 = vmatprep.subr.mxu0 0.0
    %669 = vmatpush2.xpose.msra.mxu0 0.0
    %670 = vmatprep.subr.mxu0 0.0
    %671 = vmatpush2.xpose.msra.mxu0 0.0
    %672 = vmatprep.subr.mxu0 0.0
    %673 = vmatpush2.xpose.msra.mxu0 0.0
    %674 = vmatprep.subr.mxu0 0.0
    %675 = vmatpush2.xpose.msra.mxu0 0.0
    %676 = vmatprep.subr.mxu0 0.0
    %677 = vmatpush2.xpose.msra.mxu0 0.0
    %678 = vmatprep.subr.mxu0 0.0
    %679 = vmatpush2.xpose.msra.mxu0 0.0
    %680 = vmatprep.subr.mxu0 0.0
    %681 = vmatpush2.xpose.msra.mxu0 0.0
    %682 = vmatprep.subr.mxu0 0.0
    %683 = vmatpush2.xpose.msra.mxu0 0.0
    %684 = vmatprep.subr.mxu0 0.0
    %685 = vmatpush2.xpose.msra.mxu0 0.0
    %686 = vmatprep.subr.mxu0 0.0
    %687 = vmatpush2.xpose.msra.mxu0 0.0
    %688 = vmatprep.subr.mxu0 0.0
    %689 = vmatpush2.xpose.msra.mxu0 0.0
    %690 = vmatprep.subr.mxu0 0.0
    %691 = vmatpush2.xpose.msra.mxu0 0.0
    %692 = vmatprep.subr.mxu0 0.0
    %693 = vmatpush2.xpose.msra.mxu0 0.0
    %694 = vmatprep.mubr.f32.mxu0 0.0
    %695 = vmatmul.mubr.f32.gmra.mxu0 %v625
    %v696 = vpop.f32.mrf.mxu0
    %v697 = vadd.f32 0.0, %v696
    %v698 = vpop.f32.mrf.mxu0
    %699 = vdwg.mxu0
    %vm700 = vcmask 64512
    %v701 = vsel %vm700, %v165, -inf
    %702 = vmax.xlane.f32.xlu0 %v701
    %v703 = vpop.xlane.xlu0 %702
    %v704 = vsel %vm700, %v241, -inf
    %705 = vmax.xlane.f32.xlu0 %v704
    %v706 = vpop.xlane.xlu0 %705
    %v707 = vsel %vm700, %v317, -inf
    %708 = vmax.xlane.f32.xlu0 %v707
    %v709 = vpop.xlane.xlu0 %708
    %v710 = vsel %vm700, %v393, -inf
    %711 = vmax.xlane.f32.xlu0 %v710
    %v712 = vpop.xlane.xlu0 %711
    %v713 = vsel %vm700, %v469, -inf
    %714 = vmax.xlane.f32.xlu0 %v713
    %v715 = vpop.xlane.xlu0 %714
    %v716 = vsel %vm700, %v545, -inf
    %717 = vmax.xlane.f32.xlu0 %v716
    %v718 = vpop.xlane.xlu0 %717
    %v719 = vsel %vm700, %v621, -inf
    %720 = vmax.xlane.f32.xlu0 %v719
    %v721 = vpop.xlane.xlu0 %720
    %v722 = vsel %vm700, %v697, -inf
    %723 = vmax.xlane.f32.xlu0 %v722
    %v724 = vpop.xlane.xlu0 %723
    %v725 = vsub.f32 %v165, %v703
    %v726 = vsub.f32 %v241, %v706
    %v727 = vsub.f32 %v317, %v709
    %v728 = vsub.f32 %v393, %v712
    %v729 = vsub.f32 %v469, %v715
    %v730 = vsub.f32 %v545, %v718
    %v731 = vsub.f32 %v621, %v721
    %v732 = vsub.f32 %v697, %v724
    %v733 = vmul.f32 %v725, 1.442695
    %v734 = vpow.pop %v733
    %v735 = vmul.f32 %v726, 1.442695
    %v736 = vpow.pop %v735
    %v737 = vmul.f32 %v727, 1.442695
    %v738 = vpow.pop %v737
    %v739 = vmul.f32 %v728, 1.442695
    %v740 = vpow.pop %v739
    %v741 = vmul.f32 %v729, 1.442695
    %v742 = vpow.pop %v741
    %v743 = vmul.f32 %v730, 1.442695
    %v744 = vpow.pop %v743
    %v745 = vmul.f32 %v731, 1.442695
    %v746 = vpow.pop %v745
    %v747 = vmul.f32 %v732, 1.442695
    %v748 = vpow.pop %v747
    %v749 = vsel %vm700, %v734, 0.0
    %750 = vadd.xlane.f32.xlu0 %v749
    %v751 = vpop.xlane.xlu0 %750
    %v752 = vsel %vm700, %v736, 0.0
    %753 = vadd.xlane.f32.xlu0 %v752
    %v754 = vpop.xlane.xlu0 %753
    %v755 = vsel %vm700, %v738, 0.0
    %756 = vadd.xlane.f32.xlu0 %v755
    %v757 = vpop.xlane.xlu0 %756
    %v758 = vsel %vm700, %v740, 0.0
    %759 = vadd.xlane.f32.xlu0 %v758
    %v760 = vpop.xlane.xlu0 %759
    %v761 = vsel %vm700, %v742, 0.0
    %762 = vadd.xlane.f32.xlu0 %v761
    %v763 = vpop.xlane.xlu0 %762
    %v764 = vsel %vm700, %v744, 0.0
    %765 = vadd.xlane.f32.xlu0 %v764
    %v766 = vpop.xlane.xlu0 %765
    %v767 = vsel %vm700, %v746, 0.0
    %768 = vadd.xlane.f32.xlu0 %v767
    %v769 = vpop.xlane.xlu0 %768
    %v770 = vsel %vm700, %v748, 0.0
    %771 = vadd.xlane.f32.xlu0 %v770
    %v772 = vpop.xlane.xlu0 %771
    %v773 = vrcp.pop %v751
    %v774 = vmul.f32 1.0, %v773
    %v775 = vrcp.pop %v754
    %v776 = vmul.f32 1.0, %v775
    %v777 = vrcp.pop %v757
    %v778 = vmul.f32 1.0, %v777
    %v779 = vrcp.pop %v760
    %v780 = vmul.f32 1.0, %v779
    %v781 = vrcp.pop %v763
    %v782 = vmul.f32 1.0, %v781
    %v783 = vrcp.pop %v766
    %v784 = vmul.f32 1.0, %v783
    %v785 = vrcp.pop %v769
    %v786 = vmul.f32 1.0, %v785
    %v787 = vrcp.pop %v772
    %v788 = vmul.f32 1.0, %v787
    %v789 = vmul.f32 %v734, %v774
    %v790 = vmul.f32 %v736, %v776
    %v791 = vmul.f32 %v738, %v778
    %v792 = vmul.f32 %v740, %v780
    %v793 = vmul.f32 %v742, %v782
    %v794 = vmul.f32 %v744, %v784
    %v795 = vmul.f32 %v746, %v786
    %v796 = vmul.f32 %v748, %v788
    %797 = vst.msk [vmem:[#allocation9] sm:$0xff] %vm700, %v789
    %798 = vst.msk [vmem:[#allocation9 + $0x8] sm:$0xff] %vm700, %v790
    %799 = vst.msk [vmem:[#allocation9 + $0x10] sm:$0xff] %vm700, %v791
    %800 = vst.msk [vmem:[#allocation9 + $0x18] sm:$0xff] %vm700, %v792
    %801 = vst.msk [vmem:[#allocation9 + $0x20] sm:$0xff] %vm700, %v793
    %802 = vst.msk [vmem:[#allocation9 + $0x28] sm:$0xff] %vm700, %v794
    %803 = vst.msk [vmem:[#allocation9 + $0x30] sm:$0xff] %vm700, %v795
    %804 = vst.msk [vmem:[#allocation9 + $0x38] sm:$0xff] %vm700, %v796
    %v806 = vsel %vm700, %v789, 0
    %808 = vmatprep.subr.mxu0 0.0
    %809 = vmatpush1.msra.mxu0 0.0
    %810 = vmatprep.subr.mxu0 0.0
    %811 = vmatpush1.msra.mxu0 0.0
    %812 = vmatprep.subr.mxu0 0.0
    %813 = vmatpush1.msra.mxu0 0.0
    %814 = vmatprep.subr.mxu0 0.0
    %815 = vmatpush1.msra.mxu0 0.0
    %816 = vmatprep.subr.mxu0 0.0
    %817 = vmatpush1.msra.mxu0 0.0
    %818 = vmatprep.subr.mxu0 0.0
    %819 = vmatpush1.msra.mxu0 0.0
    %820 = vmatprep.subr.mxu0 0.0
    %821 = vmatpush1.msra.mxu0 0.0
    %822 = vmatprep.subr.mxu0 0.0
    %823 = vmatpush1.msra.mxu0 0.0
    %824 = vmatprep.subr.mxu0 0.0
    %825 = vmatpush1.msra.mxu0 0.0
    %826 = vmatprep.subr.mxu0 0.0
    %827 = vmatpush1.msra.mxu0 0.0
    %828 = vmatprep.subr.mxu0 0.0
    %829 = vmatpush1.msra.mxu0 0.0
    %830 = vmatprep.subr.mxu0 0.0
    %831 = vmatpush1.msra.mxu0 0.0
    %832 = vmatprep.subr.mxu0 0.0
    %833 = vmatpush1.msra.mxu0 0.0
    %834 = vmatprep.subr.mxu0 0.0
    %835 = vmatpush1.msra.mxu0 0.0
    %836 = vmatprep.subr.mxu0 0.0
    %837 = vmatpush1.msra.mxu0 0.0
    %838 = vmatprep.subr.mxu0 0.0
    %839 = vmatpush1.msra.mxu0 %v83
    %840 = vmatprep.subr.mxu0 0.0
    %841 = vmatpush2.msra.mxu0 0.0
    %842 = vmatprep.subr.mxu0 0.0
    %843 = vmatpush2.msra.mxu0 0.0
    %844 = vmatprep.subr.mxu0 0.0
    %845 = vmatpush2.msra.mxu0 0.0
    %846 = vmatprep.subr.mxu0 0.0
    %847 = vmatpush2.msra.mxu0 0.0
    %848 = vmatprep.subr.mxu0 0.0
    %849 = vmatpush2.msra.mxu0 0.0
    %850 = vmatprep.subr.mxu0 0.0
    %851 = vmatpush2.msra.mxu0 0.0
    %852 = vmatprep.subr.mxu0 0.0
    %853 = vmatpush2.msra.mxu0 0.0
    %854 = vmatprep.subr.mxu0 0.0
    %855 = vmatpush2.msra.mxu0 0.0
    %856 = vmatprep.subr.mxu0 0.0
    %857 = vmatpush2.msra.mxu0 0.0
    %858 = vmatprep.subr.mxu0 0.0
    %859 = vmatpush2.msra.mxu0 0.0
    %860 = vmatprep.subr.mxu0 0.0
    %861 = vmatpush2.msra.mxu0 0.0
    %862 = vmatprep.subr.mxu0 0.0
    %863 = vmatpush2.msra.mxu0 0.0
    %864 = vmatprep.subr.mxu0 0.0
    %865 = vmatpush2.msra.mxu0 0.0
    %866 = vmatprep.subr.mxu0 0.0
    %867 = vmatpush2.msra.mxu0 0.0
    %868 = vmatprep.subr.mxu0 0.0
    %869 = vmatpush2.msra.mxu0 0.0
    %870 = vmatprep.subr.mxu0 0.0
    %871 = vmatpush2.msra.mxu0 0.0
    %872 = vmatprep.mubr.f32.mxu0 0.0
    %873 = vmatmul.mubr.f32.gmra.mxu0 %v806
    %v874 = vpop.f32.mrf.mxu0
    %v875 = vadd.f32 0.0, %v874
    %v876 = vpop.f32.mrf.mxu0
    %877 = vdwg.mxu0
    %v879 = vsel %vm700, %v790, 0
    %881 = vmatprep.subr.mxu0 0.0
    %882 = vmatpush1.msra.mxu0 0.0
    %883 = vmatprep.subr.mxu0 0.0
    %884 = vmatpush1.msra.mxu0 0.0
    %885 = vmatprep.subr.mxu0 0.0
    %886 = vmatpush1.msra.mxu0 0.0
    %887 = vmatprep.subr.mxu0 0.0
    %888 = vmatpush1.msra.mxu0 0.0
    %889 = vmatprep.subr.mxu0 0.0
    %890 = vmatpush1.msra.mxu0 0.0
    %891 = vmatprep.subr.mxu0 0.0
    %892 = vmatpush1.msra.mxu0 0.0
    %893 = vmatprep.subr.mxu0 0.0
    %894 = vmatpush1.msra.mxu0 0.0
    %895 = vmatprep.subr.mxu0 0.0
    %896 = vmatpush1.msra.mxu0 0.0
    %897 = vmatprep.subr.mxu0 0.0
    %898 = vmatpush1.msra.mxu0 0.0
    %899 = vmatprep.subr.mxu0 0.0
    %900 = vmatpush1.msra.mxu0 0.0
    %901 = vmatprep.subr.mxu0 0.0
    %902 = vmatpush1.msra.mxu0 0.0
    %903 = vmatprep.subr.mxu0 0.0
    %904 = vmatpush1.msra.mxu0 0.0
    %905 = vmatprep.subr.mxu0 0.0
    %906 = vmatpush1.msra.mxu0 0.0
    %907 = vmatprep.subr.mxu0 0.0
    %908 = vmatpush1.msra.mxu0 0.0
    %909 = vmatprep.subr.mxu0 0.0
    %910 = vmatpush1.msra.mxu0 0.0
    %911 = vmatprep.subr.mxu0 0.0
    %912 = vmatpush1.msra.mxu0 %v84
    %913 = vmatprep.subr.mxu0 0.0
    %914 = vmatpush2.msra.mxu0 0.0
    %915 = vmatprep.subr.mxu0 0.0
    %916 = vmatpush2.msra.mxu0 0.0
    %917 = vmatprep.subr.mxu0 0.0
    %918 = vmatpush2.msra.mxu0 0.0
    %919 = vmatprep.subr.mxu0 0.0
    %920 = vmatpush2.msra.mxu0 0.0
    %921 = vmatprep.subr.mxu0 0.0
    %922 = vmatpush2.msra.mxu0 0.0
    %923 = vmatprep.subr.mxu0 0.0
    %924 = vmatpush2.msra.mxu0 0.0
    %925 = vmatprep.subr.mxu0 0.0
    %926 = vmatpush2.msra.mxu0 0.0
    %927 = vmatprep.subr.mxu0 0.0
    %928 = vmatpush2.msra.mxu0 0.0
    %929 = vmatprep.subr.mxu0 0.0
    %930 = vmatpush2.msra.mxu0 0.0
    %931 = vmatprep.subr.mxu0 0.0
    %932 = vmatpush2.msra.mxu0 0.0
    %933 = vmatprep.subr.mxu0 0.0
    %934 = vmatpush2.msra.mxu0 0.0
    %935 = vmatprep.subr.mxu0 0.0
    %936 = vmatpush2.msra.mxu0 0.0
    %937 = vmatprep.subr.mxu0 0.0
    %938 = vmatpush2.msra.mxu0 0.0
    %939 = vmatprep.subr.mxu0 0.0
    %940 = vmatpush2.msra.mxu0 0.0
    %941 = vmatprep.subr.mxu0 0.0
    %942 = vmatpush2.msra.mxu0 0.0
    %943 = vmatprep.subr.mxu0 0.0
    %944 = vmatpush2.msra.mxu0 0.0
    %945 = vmatprep.mubr.f32.mxu0 0.0
    %946 = vmatmul.mubr.f32.gmra.mxu0 %v879
    %v947 = vpop.f32.mrf.mxu0
    %v948 = vadd.f32 0.0, %v947
    %v949 = vpop.f32.mrf.mxu0
    %950 = vdwg.mxu0
    %v952 = vsel %vm700, %v791, 0
    %954 = vmatprep.subr.mxu0 0.0
    %955 = vmatpush1.msra.mxu0 0.0
    %956 = vmatprep.subr.mxu0 0.0
    %957 = vmatpush1.msra.mxu0 0.0
    %958 = vmatprep.subr.mxu0 0.0
    %959 = vmatpush1.msra.mxu0 0.0
    %960 = vmatprep.subr.mxu0 0.0
    %961 = vmatpush1.msra.mxu0 0.0
    %962 = vmatprep.subr.mxu0 0.0
    %963 = vmatpush1.msra.mxu0 0.0
    %964 = vmatprep.subr.mxu0 0.0
    %965 = vmatpush1.msra.mxu0 0.0
    %966 = vmatprep.subr.mxu0 0.0
    %967 = vmatpush1.msra.mxu0 0.0
    %968 = vmatprep.subr.mxu0 0.0
    %969 = vmatpush1.msra.mxu0 0.0
    %970 = vmatprep.subr.mxu0 0.0
    %971 = vmatpush1.msra.mxu0 0.0
    %972 = vmatprep.subr.mxu0 0.0
    %973 = vmatpush1.msra.mxu0 0.0
    %974 = vmatprep.subr.mxu0 0.0
    %975 = vmatpush1.msra.mxu0 0.0
    %976 = vmatprep.subr.mxu0 0.0
    %977 = vmatpush1.msra.mxu0 0.0
    %978 = vmatprep.subr.mxu0 0.0
    %979 = vmatpush1.msra.mxu0 0.0
    %980 = vmatprep.subr.mxu0 0.0
    %981 = vmatpush1.msra.mxu0 0.0
    %982 = vmatprep.subr.mxu0 0.0
    %983 = vmatpush1.msra.mxu0 0.0
    %984 = vmatprep.subr.mxu0 0.0
    %985 = vmatpush1.msra.mxu0 %v85
    %986 = vmatprep.subr.mxu0 0.0
    %987 = vmatpush2.msra.mxu0 0.0
    %988 = vmatprep.subr.mxu0 0.0
    %989 = vmatpush2.msra.mxu0 0.0
    %990 = vmatprep.subr.mxu0 0.0
    %991 = vmatpush2.msra.mxu0 0.0
    %992 = vmatprep.subr.mxu0 0.0
    %993 = vmatpush2.msra.mxu0 0.0
    %994 = vmatprep.subr.mxu0 0.0
    %995 = vmatpush2.msra.mxu0 0.0
    %996 = vmatprep.subr.mxu0 0.0
    %997 = vmatpush2.msra.mxu0 0.0
    %998 = vmatprep.subr.mxu0 0.0
    %999 = vmatpush2.msra.mxu0 0.0
    %1000 = vmatprep.subr.mxu0 0.0
    %1001 = vmatpush2.msra.mxu0 0.0
    %1002 = vmatprep.subr.mxu0 0.0
    %1003 = vmatpush2.msra.mxu0 0.0
    %1004 = vmatprep.subr.mxu0 0.0
    %1005 = vmatpush2.msra.mxu0 0.0
    %1006 = vmatprep.subr.mxu0 0.0
    %1007 = vmatpush2.msra.mxu0 0.0
    %1008 = vmatprep.subr.mxu0 0.0
    %1009 = vmatpush2.msra.mxu0 0.0
    %1010 = vmatprep.subr.mxu0 0.0
    %1011 = vmatpush2.msra.mxu0 0.0
    %1012 = vmatprep.subr.mxu0 0.0
    %1013 = vmatpush2.msra.mxu0 0.0
    %1014 = vmatprep.subr.mxu0 0.0
    %1015 = vmatpush2.msra.mxu0 0.0
    %1016 = vmatprep.subr.mxu0 0.0
    %1017 = vmatpush2.msra.mxu0 0.0
    %1018 = vmatprep.mubr.f32.mxu0 0.0
    %1019 = vmatmul.mubr.f32.gmra.mxu0 %v952
    %v1020 = vpop.f32.mrf.mxu0
    %v1021 = vadd.f32 0.0, %v1020
    %v1022 = vpop.f32.mrf.mxu0
    %1023 = vdwg.mxu0
    %v1025 = vsel %vm700, %v792, 0
    %1027 = vmatprep.subr.mxu0 0.0
    %1028 = vmatpush1.msra.mxu0 0.0
    %1029 = vmatprep.subr.mxu0 0.0
    %1030 = vmatpush1.msra.mxu0 0.0
    %1031 = vmatprep.subr.mxu0 0.0
    %1032 = vmatpush1.msra.mxu0 0.0
    %1033 = vmatprep.subr.mxu0 0.0
    %1034 = vmatpush1.msra.mxu0 0.0
    %1035 = vmatprep.subr.mxu0 0.0
    %1036 = vmatpush1.msra.mxu0 0.0
    %1037 = vmatprep.subr.mxu0 0.0
    %1038 = vmatpush1.msra.mxu0 0.0
    %1039 = vmatprep.subr.mxu0 0.0
    %1040 = vmatpush1.msra.mxu0 0.0
    %1041 = vmatprep.subr.mxu0 0.0
    %1042 = vmatpush1.msra.mxu0 0.0
    %1043 = vmatprep.subr.mxu0 0.0
    %1044 = vmatpush1.msra.mxu0 0.0
    %1045 = vmatprep.subr.mxu0 0.0
    %1046 = vmatpush1.msra.mxu0 0.0
    %1047 = vmatprep.subr.mxu0 0.0
    %1048 = vmatpush1.msra.mxu0 0.0
    %1049 = vmatprep.subr.mxu0 0.0
    %1050 = vmatpush1.msra.mxu0 0.0
    %1051 = vmatprep.subr.mxu0 0.0
    %1052 = vmatpush1.msra.mxu0 0.0
    %1053 = vmatprep.subr.mxu0 0.0
    %1054 = vmatpush1.msra.mxu0 0.0
    %1055 = vmatprep.subr.mxu0 0.0
    %1056 = vmatpush1.msra.mxu0 0.0
    %1057 = vmatprep.subr.mxu0 0.0
    %1058 = vmatpush1.msra.mxu0 %v86
    %1059 = vmatprep.subr.mxu0 0.0
    %1060 = vmatpush2.msra.mxu0 0.0
    %1061 = vmatprep.subr.mxu0 0.0
    %1062 = vmatpush2.msra.mxu0 0.0
    %1063 = vmatprep.subr.mxu0 0.0
    %1064 = vmatpush2.msra.mxu0 0.0
    %1065 = vmatprep.subr.mxu0 0.0
    %1066 = vmatpush2.msra.mxu0 0.0
    %1067 = vmatprep.subr.mxu0 0.0
    %1068 = vmatpush2.msra.mxu0 0.0
    %1069 = vmatprep.subr.mxu0 0.0
    %1070 = vmatpush2.msra.mxu0 0.0
    %1071 = vmatprep.subr.mxu0 0.0
    %1072 = vmatpush2.msra.mxu0 0.0
    %1073 = vmatprep.subr.mxu0 0.0
    %1074 = vmatpush2.msra.mxu0 0.0
    %1075 = vmatprep.subr.mxu0 0.0
    %1076 = vmatpush2.msra.mxu0 0.0
    %1077 = vmatprep.subr.mxu0 0.0
    %1078 = vmatpush2.msra.mxu0 0.0
    %1079 = vmatprep.subr.mxu0 0.0
    %1080 = vmatpush2.msra.mxu0 0.0
    %1081 = vmatprep.subr.mxu0 0.0
    %1082 = vmatpush2.msra.mxu0 0.0
    %1083 = vmatprep.subr.mxu0 0.0
    %1084 = vmatpush2.msra.mxu0 0.0
    %1085 = vmatprep.subr.mxu0 0.0
    %1086 = vmatpush2.msra.mxu0 0.0
    %1087 = vmatprep.subr.mxu0 0.0
    %1088 = vmatpush2.msra.mxu0 0.0
    %1089 = vmatprep.subr.mxu0 0.0
    %1090 = vmatpush2.msra.mxu0 0.0
    %1091 = vmatprep.mubr.f32.mxu0 0.0
    %1092 = vmatmul.mubr.f32.gmra.mxu0 %v1025
    %v1093 = vpop.f32.mrf.mxu0
    %v1094 = vadd.f32 0.0, %v1093
    %v1095 = vpop.f32.mrf.mxu0
    %1096 = vdwg.mxu0
    %v1098 = vsel %vm700, %v793, 0
    %1100 = vmatprep.subr.mxu0 0.0
    %1101 = vmatpush1.msra.mxu0 0.0
    %1102 = vmatprep.subr.mxu0 0.0
    %1103 = vmatpush1.msra.mxu0 0.0
    %1104 = vmatprep.subr.mxu0 0.0
    %1105 = vmatpush1.msra.mxu0 0.0
    %1106 = vmatprep.subr.mxu0 0.0
    %1107 = vmatpush1.msra.mxu0 0.0
    %1108 = vmatprep.subr.mxu0 0.0
    %1109 = vmatpush1.msra.mxu0 0.0
    %1110 = vmatprep.subr.mxu0 0.0
    %1111 = vmatpush1.msra.mxu0 0.0
    %1112 = vmatprep.subr.mxu0 0.0
    %1113 = vmatpush1.msra.mxu0 0.0
    %1114 = vmatprep.subr.mxu0 0.0
    %1115 = vmatpush1.msra.mxu0 0.0
    %1116 = vmatprep.subr.mxu0 0.0
    %1117 = vmatpush1.msra.mxu0 0.0
    %1118 = vmatprep.subr.mxu0 0.0
    %1119 = vmatpush1.msra.mxu0 0.0
    %1120 = vmatprep.subr.mxu0 0.0
    %1121 = vmatpush1.msra.mxu0 0.0
    %1122 = vmatprep.subr.mxu0 0.0
    %1123 = vmatpush1.msra.mxu0 0.0
    %1124 = vmatprep.subr.mxu0 0.0
    %1125 = vmatpush1.msra.mxu0 0.0
    %1126 = vmatprep.subr.mxu0 0.0
    %1127 = vmatpush1.msra.mxu0 0.0
    %1128 = vmatprep.subr.mxu0 0.0
    %1129 = vmatpush1.msra.mxu0 0.0
    %1130 = vmatprep.subr.mxu0 0.0
    %1131 = vmatpush1.msra.mxu0 %v87
    %1132 = vmatprep.subr.mxu0 0.0
    %1133 = vmatpush2.msra.mxu0 0.0
    %1134 = vmatprep.subr.mxu0 0.0
    %1135 = vmatpush2.msra.mxu0 0.0
    %1136 = vmatprep.subr.mxu0 0.0
    %1137 = vmatpush2.msra.mxu0 0.0
    %1138 = vmatprep.subr.mxu0 0.0
    %1139 = vmatpush2.msra.mxu0 0.0
    %1140 = vmatprep.subr.mxu0 0.0
    %1141 = vmatpush2.msra.mxu0 0.0
    %1142 = vmatprep.subr.mxu0 0.0
    %1143 = vmatpush2.msra.mxu0 0.0
    %1144 = vmatprep.subr.mxu0 0.0
    %1145 = vmatpush2.msra.mxu0 0.0
    %1146 = vmatprep.subr.mxu0 0.0
    %1147 = vmatpush2.msra.mxu0 0.0
    %1148 = vmatprep.subr.mxu0 0.0
    %1149 = vmatpush2.msra.mxu0 0.0
    %1150 = vmatprep.subr.mxu0 0.0
    %1151 = vmatpush2.msra.mxu0 0.0
    %1152 = vmatprep.subr.mxu0 0.0
    %1153 = vmatpush2.msra.mxu0 0.0
    %1154 = vmatprep.subr.mxu0 0.0
    %1155 = vmatpush2.msra.mxu0 0.0
    %1156 = vmatprep.subr.mxu0 0.0
    %1157 = vmatpush2.msra.mxu0 0.0
    %1158 = vmatprep.subr.mxu0 0.0
    %1159 = vmatpush2.msra.mxu0 0.0
    %1160 = vmatprep.subr.mxu0 0.0
    %1161 = vmatpush2.msra.mxu0 0.0
    %1162 = vmatprep.subr.mxu0 0.0
    %1163 = vmatpush2.msra.mxu0 0.0
    %1164 = vmatprep.mubr.f32.mxu0 0.0
    %1165 = vmatmul.mubr.f32.gmra.mxu0 %v1098
    %v1166 = vpop.f32.mrf.mxu0
    %v1167 = vadd.f32 0.0, %v1166
    %v1168 = vpop.f32.mrf.mxu0
    %1169 = vdwg.mxu0
    %v1171 = vsel %vm700, %v794, 0
    %1173 = vmatprep.subr.mxu0 0.0
    %1174 = vmatpush1.msra.mxu0 0.0
    %1175 = vmatprep.subr.mxu0 0.0
    %1176 = vmatpush1.msra.mxu0 0.0
    %1177 = vmatprep.subr.mxu0 0.0
    %1178 = vmatpush1.msra.mxu0 0.0
    %1179 = vmatprep.subr.mxu0 0.0
    %1180 = vmatpush1.msra.mxu0 0.0
    %1181 = vmatprep.subr.mxu0 0.0
    %1182 = vmatpush1.msra.mxu0 0.0
    %1183 = vmatprep.subr.mxu0 0.0
    %1184 = vmatpush1.msra.mxu0 0.0
    %1185 = vmatprep.subr.mxu0 0.0
    %1186 = vmatpush1.msra.mxu0 0.0
    %1187 = vmatprep.subr.mxu0 0.0
    %1188 = vmatpush1.msra.mxu0 0.0
    %1189 = vmatprep.subr.mxu0 0.0
    %1190 = vmatpush1.msra.mxu0 0.0
    %1191 = vmatprep.subr.mxu0 0.0
    %1192 = vmatpush1.msra.mxu0 0.0
    %1193 = vmatprep.subr.mxu0 0.0
    %1194 = vmatpush1.msra.mxu0 0.0
    %1195 = vmatprep.subr.mxu0 0.0
    %1196 = vmatpush1.msra.mxu0 0.0
    %1197 = vmatprep.subr.mxu0 0.0
    %1198 = vmatpush1.msra.mxu0 0.0
    %1199 = vmatprep.subr.mxu0 0.0
    %1200 = vmatpush1.msra.mxu0 0.0
    %1201 = vmatprep.subr.mxu0 0.0
    %1202 = vmatpush1.msra.mxu0 0.0
    %1203 = vmatprep.subr.mxu0 0.0
    %1204 = vmatpush1.msra.mxu0 %v88
    %1205 = vmatprep.subr.mxu0 0.0
    %1206 = vmatpush2.msra.mxu0 0.0
    %1207 = vmatprep.subr.mxu0 0.0
    %1208 = vmatpush2.msra.mxu0 0.0
    %1209 = vmatprep.subr.mxu0 0.0
    %1210 = vmatpush2.msra.mxu0 0.0
    %1211 = vmatprep.subr.mxu0 0.0
    %1212 = vmatpush2.msra.mxu0 0.0
    %1213 = vmatprep.subr.mxu0 0.0
    %1214 = vmatpush2.msra.mxu0 0.0
    %1215 = vmatprep.subr.mxu0 0.0
    %1216 = vmatpush2.msra.mxu0 0.0
    %1217 = vmatprep.subr.mxu0 0.0
    %1218 = vmatpush2.msra.mxu0 0.0
    %1219 = vmatprep.subr.mxu0 0.0
    %1220 = vmatpush2.msra.mxu0 0.0
    %1221 = vmatprep.subr.mxu0 0.0
    %1222 = vmatpush2.msra.mxu0 0.0
    %1223 = vmatprep.subr.mxu0 0.0
    %1224 = vmatpush2.msra.mxu0 0.0
    %1225 = vmatprep.subr.mxu0 0.0
    %1226 = vmatpush2.msra.mxu0 0.0
    %1227 = vmatprep.subr.mxu0 0.0
    %1228 = vmatpush2.msra.mxu0 0.0
    %1229 = vmatprep.subr.mxu0 0.0
    %1230 = vmatpush2.msra.mxu0 0.0
    %1231 = vmatprep.subr.mxu0 0.0
    %1232 = vmatpush2.msra.mxu0 0.0
    %1233 = vmatprep.subr.mxu0 0.0
    %1234 = vmatpush2.msra.mxu0 0.0
    %1235 = vmatprep.subr.mxu0 0.0
    %1236 = vmatpush2.msra.mxu0 0.0
    %1237 = vmatprep.mubr.f32.mxu0 0.0
    %1238 = vmatmul.mubr.f32.gmra.mxu0 %v1171
    %v1239 = vpop.f32.mrf.mxu0
    %v1240 = vadd.f32 0.0, %v1239
    %v1241 = vpop.f32.mrf.mxu0
    %1242 = vdwg.mxu0
    %v1244 = vsel %vm700, %v795, 0
    %1246 = vmatprep.subr.mxu0 0.0
    %1247 = vmatpush1.msra.mxu0 0.0
    %1248 = vmatprep.subr.mxu0 0.0
    %1249 = vmatpush1.msra.mxu0 0.0
    %1250 = vmatprep.subr.mxu0 0.0
    %1251 = vmatpush1.msra.mxu0 0.0
    %1252 = vmatprep.subr.mxu0 0.0
    %1253 = vmatpush1.msra.mxu0 0.0
    %1254 = vmatprep.subr.mxu0 0.0
    %1255 = vmatpush1.msra.mxu0 0.0
    %1256 = vmatprep.subr.mxu0 0.0
    %1257 = vmatpush1.msra.mxu0 0.0
    %1258 = vmatprep.subr.mxu0 0.0
    %1259 = vmatpush1.msra.mxu0 0.0
    %1260 = vmatprep.subr.mxu0 0.0
    %1261 = vmatpush1.msra.mxu0 0.0
    %1262 = vmatprep.subr.mxu0 0.0
    %1263 = vmatpush1.msra.mxu0 0.0
    %1264 = vmatprep.subr.mxu0 0.0
    %1265 = vmatpush1.msra.mxu0 0.0
    %1266 = vmatprep.subr.mxu0 0.0
    %1267 = vmatpush1.msra.mxu0 0.0
    %1268 = vmatprep.subr.mxu0 0.0
    %1269 = vmatpush1.msra.mxu0 0.0
    %1270 = vmatprep.subr.mxu0 0.0
    %1271 = vmatpush1.msra.mxu0 0.0
    %1272 = vmatprep.subr.mxu0 0.0
    %1273 = vmatpush1.msra.mxu0 0.0
    %1274 = vmatprep.subr.mxu0 0.0
    %1275 = vmatpush1.msra.mxu0 0.0
    %1276 = vmatprep.subr.mxu0 0.0
    %1277 = vmatpush1.msra.mxu0 %v89
    %1278 = vmatprep.subr.mxu0 0.0
    %1279 = vmatpush2.msra.mxu0 0.0
    %1280 = vmatprep.subr.mxu0 0.0
    %1281 = vmatpush2.msra.mxu0 0.0
    %1282 = vmatprep.subr.mxu0 0.0
    %1283 = vmatpush2.msra.mxu0 0.0
    %1284 = vmatprep.subr.mxu0 0.0
    %1285 = vmatpush2.msra.mxu0 0.0
    %1286 = vmatprep.subr.mxu0 0.0
    %1287 = vmatpush2.msra.mxu0 0.0
    %1288 = vmatprep.subr.mxu0 0.0
    %1289 = vmatpush2.msra.mxu0 0.0
    %1290 = vmatprep.subr.mxu0 0.0
    %1291 = vmatpush2.msra.mxu0 0.0
    %1292 = vmatprep.subr.mxu0 0.0
    %1293 = vmatpush2.msra.mxu0 0.0
    %1294 = vmatprep.subr.mxu0 0.0
    %1295 = vmatpush2.msra.mxu0 0.0
    %1296 = vmatprep.subr.mxu0 0.0
    %1297 = vmatpush2.msra.mxu0 0.0
    %1298 = vmatprep.subr.mxu0 0.0
    %1299 = vmatpush2.msra.mxu0 0.0
    %1300 = vmatprep.subr.mxu0 0.0
    %1301 = vmatpush2.msra.mxu0 0.0
    %1302 = vmatprep.subr.mxu0 0.0
    %1303 = vmatpush2.msra.mxu0 0.0
    %1304 = vmatprep.subr.mxu0 0.0
    %1305 = vmatpush2.msra.mxu0 0.0
    %1306 = vmatprep.subr.mxu0 0.0
    %1307 = vmatpush2.msra.mxu0 0.0
    %1308 = vmatprep.subr.mxu0 0.0
    %1309 = vmatpush2.msra.mxu0 0.0
    %1310 = vmatprep.mubr.f32.mxu0 0.0
    %1311 = vmatmul.mubr.f32.gmra.mxu0 %v1244
    %v1312 = vpop.f32.mrf.mxu0
    %v1313 = vadd.f32 0.0, %v1312
    %v1314 = vpop.f32.mrf.mxu0
    %1315 = vdwg.mxu0
    %v1317 = vsel %vm700, %v796, 0
    %1319 = vmatprep.subr.mxu0 0.0
    %1320 = vmatpush1.msra.mxu0 0.0
    %1321 = vmatprep.subr.mxu0 0.0
    %1322 = vmatpush1.msra.mxu0 0.0
    %1323 = vmatprep.subr.mxu0 0.0
    %1324 = vmatpush1.msra.mxu0 0.0
    %1325 = vmatprep.subr.mxu0 0.0
    %1326 = vmatpush1.msra.mxu0 0.0
    %1327 = vmatprep.subr.mxu0 0.0
    %1328 = vmatpush1.msra.mxu0 0.0
    %1329 = vmatprep.subr.mxu0 0.0
    %1330 = vmatpush1.msra.mxu0 0.0
    %1331 = vmatprep.subr.mxu0 0.0
    %1332 = vmatpush1.msra.mxu0 0.0
    %1333 = vmatprep.subr.mxu0 0.0
    %1334 = vmatpush1.msra.mxu0 0.0
    %1335 = vmatprep.subr.mxu0 0.0
    %1336 = vmatpush1.msra.mxu0 0.0
    %1337 = vmatprep.subr.mxu0 0.0
    %1338 = vmatpush1.msra.mxu0 0.0
    %1339 = vmatprep.subr.mxu0 0.0
    %1340 = vmatpush1.msra.mxu0 0.0
    %1341 = vmatprep.subr.mxu0 0.0
    %1342 = vmatpush1.msra.mxu0 0.0
    %1343 = vmatprep.subr.mxu0 0.0
    %1344 = vmatpush1.msra.mxu0 0.0
    %1345 = vmatprep.subr.mxu0 0.0
    %1346 = vmatpush1.msra.mxu0 0.0
    %1347 = vmatprep.subr.mxu0 0.0
    %1348 = vmatpush1.msra.mxu0 0.0
    %1349 = vmatprep.subr.mxu0 0.0
    %1350 = vmatpush1.msra.mxu0 %v90
    %1351 = vmatprep.subr.mxu0 0.0
    %1352 = vmatpush2.msra.mxu0 0.0
    %1353 = vmatprep.subr.mxu0 0.0
    %1354 = vmatpush2.msra.mxu0 0.0
    %1355 = vmatprep.subr.mxu0 0.0
    %1356 = vmatpush2.msra.mxu0 0.0
    %1357 = vmatprep.subr.mxu0 0.0
    %1358 = vmatpush2.msra.mxu0 0.0
    %1359 = vmatprep.subr.mxu0 0.0
    %1360 = vmatpush2.msra.mxu0 0.0
    %1361 = vmatprep.subr.mxu0 0.0
    %1362 = vmatpush2.msra.mxu0 0.0
    %1363 = vmatprep.subr.mxu0 0.0
    %1364 = vmatpush2.msra.mxu0 0.0
    %1365 = vmatprep.subr.mxu0 0.0
    %1366 = vmatpush2.msra.mxu0 0.0
    %1367 = vmatprep.subr.mxu0 0.0
    %1368 = vmatpush2.msra.mxu0 0.0
    %1369 = vmatprep.subr.mxu0 0.0
    %1370 = vmatpush2.msra.mxu0 0.0
    %1371 = vmatprep.subr.mxu0 0.0
    %1372 = vmatpush2.msra.mxu0 0.0
    %1373 = vmatprep.subr.mxu0 0.0
    %1374 = vmatpush2.msra.mxu0 0.0
    %1375 = vmatprep.subr.mxu0 0.0
    %1376 = vmatpush2.msra.mxu0 0.0
    %1377 = vmatprep.subr.mxu0 0.0
    %1378 = vmatpush2.msra.mxu0 0.0
    %1379 = vmatprep.subr.mxu0 0.0
    %1380 = vmatpush2.msra.mxu0 0.0
    %1381 = vmatprep.subr.mxu0 0.0
    %1382 = vmatpush2.msra.mxu0 0.0
    %1383 = vmatprep.mubr.f32.mxu0 0.0
    %1384 = vmatmul.mubr.f32.gmra.mxu0 %v1317
    %v1385 = vpop.f32.mrf.mxu0
    %v1386 = vadd.f32 0.0, %v1385
    %v1387 = vpop.f32.mrf.mxu0
    %1388 = vdwg.mxu0
    %1389 = vst.msk [vmem:[#allocation8] sm:$0xff] %vm91, %v875
    %1390 = vst.msk [vmem:[#allocation8 + $0x8] sm:$0xff] %vm91, %v948
    %1391 = vst.msk [vmem:[#allocation8 + $0x10] sm:$0xff] %vm91, %v1021
    %1392 = vst.msk [vmem:[#allocation8 + $0x18] sm:$0xff] %vm91, %v1094
    %1393 = vst.msk [vmem:[#allocation8 + $0x20] sm:$0xff] %vm91, %v1167
    %1394 = vst.msk [vmem:[#allocation8 + $0x28] sm:$0xff] %vm91, %v1240
    %1395 = vst.msk [vmem:[#allocation8 + $0x30] sm:$0xff] %vm91, %v1313
    %1396 = vst.msk [vmem:[#allocation8 + $0x38] sm:$0xff] %vm91, %v1386
    // Predicated region
    $region26: #{tpu_custom_call.1} parent=1 // pred_check
      _
    $region27: #{tpu_custom_call.1} parent=1 // pred_check_branch
      %1398 = sbr.rel (0) target = $region29
    $region28: #{tpu_custom_call.1} parent=1 // pred_region
      %s1400 = ssub.s32 1024, 1024
      %1401 = vsyncadd [#allocation4], %s1400
      %s1402 = sshll.u32 [#allocation8], 4
      %s1403 = int_to_ptr.vmem [resolvable:$true] %s1402
      %1408 = dma.vmem_to_hbm [thread:$0]  %s1403, 1024, %s3, [#allocation4], 128, 128, 8
    $region29: #{tpu_custom_call.1} parent=1 // pred_fallthru
      _
    // Predicated region
    $region30: #{tpu_custom_call.1} parent=1 // pred_check
      _
    $region31: #{tpu_custom_call.1} parent=1 // pred_check_branch
      %1410 = sbr.rel (0) target = $region33
    $region32: #{tpu_custom_call.1} parent=1 // pred_region
      %s1412 = ssub.s32 1024, 1024
      %1413 = vsyncadd [#allocation10], %s1412
      %s1414 = sshll.u32 [#allocation9], 4
      %s1415 = int_to_ptr.vmem [resolvable:$true] %s1414
      %1420 = dma.vmem_to_hbm [thread:$0]  %s1415, 1024, %s4, [#allocation10], 128, 128, 8
    $region33: #{tpu_custom_call.1} parent=1 // pred_fallthru
      _
    // Predicated region
    $region34: #{tpu_custom_call.1} parent=1 // pred_check
      _
    $region35: #{tpu_custom_call.1} parent=1 // pred_check_branch
      %1422 = sbr.rel (0) target = $region37
    $region36: #{tpu_custom_call.1} parent=1 // pred_region
      %1423 = dma.done [#allocation4], 1024
    $region37: #{tpu_custom_call.1} parent=1 // pred_fallthru
      _
    // Predicated region
    $region38: #{tpu_custom_call.1} parent=1 // pred_check
      _
    $region39: #{tpu_custom_call.1} parent=1 // pred_check_branch
      %1425 = sbr.rel (0) target = $region41
    $region40: #{tpu_custom_call.1} parent=1 // pred_region
      %1426 = dma.done [#allocation10], 1024
    $region41: #{tpu_custom_call.1} parent=1 // pred_fallthru
      _
    %1427 = vsyncpa [#allocation3], 1
    %1428 = vsyncpa [#allocation6], 1
    %1429 = vsyncpa [#allocation4], 1
    %1430 = vsyncpa [#allocation10], 1

</llo_original>
